<compile_context>
chip_gen: v7x
topology: tpu7x:2x2x1
jax: 0.10.0
libtpu: 0.0.40
codegen_flags: <defaults>
</compile_context>

<pallas_src>
import jax
import jax.numpy as jnp
from jax.experimental import pallas as pl
from jax.experimental.pallas import tpu as pltpu

# ----------------------------- model sizes ----------------------------------
B = 2            # batch
S = 8            # sequence length
H = 32           # encoder hidden size (core.config.hidden_size)
HIDDEN = 32      # args.hidden_size
PRIMARY = 16     # primary_size (intent classes)
SECONDARY = 8    # secondary_size (slot classes)
V = 64           # vocab size
MAX_POS = 16
CLS_ID = 1

F32 = jnp.float32
_NEG = -1e9


# ---------------------------- in-kernel helpers ------------------------------

def _ln(x, g, b, eps):
    mu = jnp.mean(x, axis=-1, keepdims=True)
    var = jnp.mean((x - mu) ** 2, axis=-1, keepdims=True)
    return (x - mu) * jax.lax.rsqrt(var + eps) * g + b


def _gelu(x):
    # tanh-approximate GELU (VPU/EUP ops only).
    c = 0.7978845608028654  # sqrt(2/pi)
    return 0.5 * x * (1.0 + jnp.tanh(c * (x + 0.044715 * x * x * x)))


def _full(shape):
    # Full-array block for a single-step grid.
    return pl.BlockSpec(shape, lambda i, n=len(shape): (0,) * n)


# ============================ fused Pallas kernel ============================

def _fused_forward_kernel(ids_ref, mask_ref,
                          wemb_ref, pemb_ref,
                          gln_e_ref, bln_e_ref,
                          wqkv_ref, bqkv_ref, wo_ref, bo_ref,
                          gln1_ref, bln1_ref,
                          wfc_ref, bfc_ref, wpr_ref, bpr_ref,
                          gln2_ref, bln2_ref,
                          wd_ref, bd_ref, wc_ref, bc_ref,
                          it_ref, st_ref,
                          intent_ref, slot_ref, loss_ref):
    Bc, Sc = ids_ref.shape
    Vc, Hc = wemb_ref.shape
    N = Bc * Sc

    # ---- embedding lookup as a gather-free one-hot matmul (MXU) ----
    ids = ids_ref[...]                                                # (B,S) int32
    vio = jax.lax.broadcasted_iota(jnp.int32, (Bc, Sc, Vc), 2)
    onehot = (vio == ids[:, :, None]).astype(F32)                     # (B,S,V)
    emb = jnp.dot(onehot.reshape(N, Vc), wemb_ref[...],
                  preferred_element_type=F32)                         # (N,H)
    pos = pemb_ref[...][:Sc, :]                                       # (S,H)
    emb = (emb.reshape(Bc, Sc, Hc) + pos[None, :, :]).reshape(N, Hc)

    x = _ln(emb, gln_e_ref[...], bln_e_ref[...], 1e-12)

    # ---- fused QKV projection: one (B*S, H) x (H, 3H) matmul ----
    qkv = jnp.dot(x, wqkv_ref[...], preferred_element_type=F32) + bqkv_ref[...]
    q = qkv[:, :Hc].reshape(Bc, Sc, Hc)
    k = qkv[:, Hc:2 * Hc].reshape(Bc, Sc, Hc)
    v = qkv[:, 2 * Hc:].reshape(Bc, Sc, Hc)

    # additive mask built in-kernel from the (B,S) int mask
    bias = (1.0 - mask_ref[...].astype(F32)) * _NEG                   # (B,S)
    s = jnp.einsum('bqd,bkd->bqk', q, k, preferred_element_type=F32)
    s = s * (1.0 / (Hc ** 0.5)) + bias[:, None, :]
    s = s - jnp.max(s, axis=-1, keepdims=True)
    p = jnp.exp(s)
    p = p / jnp.sum(p, axis=-1, keepdims=True)
    ctx = jnp.einsum('bqk,bkd->bqd', p, v, preferred_element_type=F32)
    ctx = ctx.reshape(N, Hc)

    attn = jnp.dot(ctx, wo_ref[...], preferred_element_type=F32) + bo_ref[...]
    x = _ln(x + attn, gln1_ref[...], bln1_ref[...], 1e-12)

    hf = jnp.dot(x, wfc_ref[...], preferred_element_type=F32) + bfc_ref[...]
    hf = _gelu(hf)
    f = jnp.dot(hf, wpr_ref[...], preferred_element_type=F32) + bpr_ref[...]
    x = _ln(x + f, gln2_ref[...], bln2_ref[...], 1e-12)

    # last hidden state, CLS token only
    cls = x.reshape(Bc, Sc, Hc)[:, 0, :]                              # (B,H)

    # ---- dual head: dropout -> dense -> gelu -> dropout (identity) ----
    h = jnp.dot(cls, wd_ref[...], preferred_element_type=F32) + bd_ref[...]
    h = _gelu(h)
    # fused primary|secondary classifier: one (B, HIDDEN) x (HIDDEN, P+Q) matmul
    logits = jnp.dot(h, wc_ref[...], preferred_element_type=F32) + bc_ref[...]
    intent_logits = logits[:, :PRIMARY]
    slot_logits = logits[:, PRIMARY:]
    intent_ref[...] = intent_logits
    slot_ref[...] = slot_logits

    def ce_sum(lg, tgt):
        # standard CE with class-index targets, summed over the batch
        m = jnp.max(lg, axis=-1, keepdims=True)
        lse = jnp.log(jnp.sum(jnp.exp(lg - m), axis=-1, keepdims=True)) + m
        col = jax.lax.broadcasted_iota(jnp.int32, lg.shape, 1)
        oh = (col == tgt).astype(F32)
        picked = jnp.sum(lg * oh, axis=-1, keepdims=True)
        return jnp.sum(lse - picked, keepdims=True)                   # (1,1)

    li = ce_sum(intent_logits, it_ref[...])
    ls = ce_sum(slot_logits, st_ref[...])
    loss_ref[...] = (li + ls) * (1.0 / Bc)                            # mean over batch


# ============================ wrapper ========================================

def dual_classifier_forward(params, input_ids, attention_mask, targets,
                            outcome='logit'):
    enc = params['enc']
    head = params['head']
    args = [input_ids.astype(jnp.int32), attention_mask.astype(jnp.int32),
            enc['word_emb'], enc['pos_emb'],
            enc['emb_ln_g'], enc['emb_ln_b'],
            enc['w_qkv'], enc['b_qkv'], enc['w_o'], enc['b_o'],
            enc['ln1_g'], enc['ln1_b'],
            enc['w_fc'], enc['b_fc'], enc['w_proj'], enc['b_proj'],
            enc['ln2_g'], enc['ln2_b'],
            head['w_dense'], head['b_dense'], head['w_cls'], head['b_cls'],
            targets['intent'].reshape(B, 1).astype(jnp.int32),
            targets['slot'].reshape(B, 1).astype(jnp.int32)]

    out_shapes = (jax.ShapeDtypeStruct((B, PRIMARY), F32),
                  jax.ShapeDtypeStruct((B, SECONDARY), F32),
                  jax.ShapeDtypeStruct((1, 1), F32))

    intent_logits, slot_logits, loss = pl.pallas_call(
        _fused_forward_kernel,
        out_shape=out_shapes,
        grid=(1,),
        in_specs=[_full(a.shape) for a in args],
        out_specs=(_full((B, PRIMARY)), _full((B, SECONDARY)), _full((1, 1))),
        compiler_params=pltpu.CompilerParams(dimension_semantics=("arbitrary",)),
    )(*args)

    if outcome == 'logit':
        output = {'intent': intent_logits, 'slot': slot_logits}
    else:
        output = {'intent': jax.nn.log_softmax(intent_logits, axis=1),
                  'slot': jax.nn.log_softmax(slot_logits, axis=1)}
    return output, loss[0, 0]


# ============================ parameter init =================================

def init_params(key):
    keys = iter(jax.random.split(key, 32))

    def W(*shape, scale=0.02):
        return scale * jax.random.normal(next(keys), shape, dtype=F32)

    zeros = lambda *s: jnp.zeros(s, F32)
    ones = lambda *s: jnp.ones(s, F32)

    enc = dict(
        word_emb=W(V, H), pos_emb=W(MAX_POS, H),
        emb_ln_g=ones(1, H), emb_ln_b=zeros(1, H),
        w_qkv=W(H, 3 * H), b_qkv=zeros(1, 3 * H),           # fused Q|K|V
        w_o=W(H, H), b_o=zeros(1, H),
        ln1_g=ones(1, H), ln1_b=zeros(1, H),
        w_fc=W(H, 4 * H), b_fc=zeros(1, 4 * H),
        w_proj=W(4 * H, H), b_proj=zeros(1, H),
        ln2_g=ones(1, H), ln2_b=zeros(1, H),
    )
    head = dict(
        w_dense=W(H, HIDDEN), b_dense=zeros(1, HIDDEN),
        w_cls=W(HIDDEN, PRIMARY + SECONDARY),                # fused primary|secondary
        b_cls=zeros(1, PRIMARY + SECONDARY),
    )
    return dict(enc=enc, head=head)


# ================================ main =======================================

if __name__ == "__main__":
    key = jax.random.PRNGKey(0)
    kp, kids, kint, kslot = jax.random.split(key, 4)

    params = init_params(kp)

    input_ids = jax.random.randint(kids, (B, S), 3, V).astype(jnp.int32)
    input_ids = input_ids.at[:, 0].set(CLS_ID)
    attention_mask = jnp.ones((B, S), jnp.int32).at[1, 7].set(0)

    targets = {
        'intent': jax.random.randint(kint, (B,), 0, PRIMARY).astype(jnp.int32),
        'slot': jax.random.randint(kslot, (B,), 0, SECONDARY).astype(jnp.int32),
    }

    fwd = jax.jit(dual_classifier_forward)
    output, loss = fwd(params, input_ids, attention_mask, targets)
    jax.block_until_ready((output, loss))

    assert output['intent'].shape == (B, PRIMARY)
    assert output['slot'].shape == (B, SECONDARY)
    assert bool(jnp.isfinite(loss))
    print("KERNEL_OK")
</pallas_src>

<mosaic_0001>
module attributes {stable_mosaic.version = 11 : i64} {
  func.func @_fused_forward_kernel(%arg0: i32, %arg1: memref<2x8xi32, #tpu.memory_space<vmem>>, %arg2: memref<2x8xi32, #tpu.memory_space<vmem>>, %arg3: memref<64x32xf32, #tpu.memory_space<vmem>>, %arg4: memref<16x32xf32, #tpu.memory_space<vmem>>, %arg5: memref<1x32xf32, #tpu.memory_space<vmem>>, %arg6: memref<1x32xf32, #tpu.memory_space<vmem>>, %arg7: memref<32x96xf32, #tpu.memory_space<vmem>>, %arg8: memref<1x96xf32, #tpu.memory_space<vmem>>, %arg9: memref<32x32xf32, #tpu.memory_space<vmem>>, %arg10: memref<1x32xf32, #tpu.memory_space<vmem>>, %arg11: memref<1x32xf32, #tpu.memory_space<vmem>>, %arg12: memref<1x32xf32, #tpu.memory_space<vmem>>, %arg13: memref<32x128xf32, #tpu.memory_space<vmem>>, %arg14: memref<1x128xf32, #tpu.memory_space<vmem>>, %arg15: memref<128x32xf32, #tpu.memory_space<vmem>>, %arg16: memref<1x32xf32, #tpu.memory_space<vmem>>, %arg17: memref<1x32xf32, #tpu.memory_space<vmem>>, %arg18: memref<1x32xf32, #tpu.memory_space<vmem>>, %arg19: memref<32x32xf32, #tpu.memory_space<vmem>>, %arg20: memref<1x32xf32, #tpu.memory_space<vmem>>, %arg21: memref<32x24xf32, #tpu.memory_space<vmem>>, %arg22: memref<1x24xf32, #tpu.memory_space<vmem>>, %arg23: memref<2x1xi32, #tpu.memory_space<vmem>>, %arg24: memref<2x1xi32, #tpu.memory_space<vmem>>, %arg25: memref<2x16xf32, #tpu.memory_space<vmem>>, %arg26: memref<2x8xf32, #tpu.memory_space<vmem>>, %arg27: memref<1x1xf32, #tpu.memory_space<vmem>>) attributes {dimension_semantics = [#tpu.dimension_semantics<arbitrary>], iteration_bounds = array<i64: 1>, scalar_prefetch = 0 : i64, scratch_operands = 0 : i64, tpu.core_type = #tpu.core_type<tc>, window_params = [{pipeline_mode = #tpu.pipeline_mode<synchronous>, transform_indices = @transform_0, window_bounds = array<i64: 2, 8>}, {pipeline_mode = #tpu.pipeline_mode<synchronous>, transform_indices = @transform_1, window_bounds = array<i64: 2, 8>}, {pipeline_mode = #tpu.pipeline_mode<synchronous>, transform_indices = @transform_2, window_bounds = array<i64: 64, 32>}, {pipeline_mode = #tpu.pipeline_mode<synchronous>, transform_indices = @transform_3, window_bounds = array<i64: 16, 32>}, {pipeline_mode = #tpu.pipeline_mode<synchronous>, transform_indices = @transform_4, window_bounds = array<i64: 1, 32>}, {pipeline_mode = #tpu.pipeline_mode<synchronous>, transform_indices = @transform_5, window_bounds = array<i64: 1, 32>}, {pipeline_mode = #tpu.pipeline_mode<synchronous>, transform_indices = @transform_6, window_bounds = array<i64: 32, 96>}, {pipeline_mode = #tpu.pipeline_mode<synchronous>, transform_indices = @transform_7, window_bounds = array<i64: 1, 96>}, {pipeline_mode = #tpu.pipeline_mode<synchronous>, transform_indices = @transform_8, window_bounds = array<i64: 32, 32>}, {pipeline_mode = #tpu.pipeline_mode<synchronous>, transform_indices = @transform_9, window_bounds = array<i64: 1, 32>}, {pipeline_mode = #tpu.pipeline_mode<synchronous>, transform_indices = @transform_10, window_bounds = array<i64: 1, 32>}, {pipeline_mode = #tpu.pipeline_mode<synchronous>, transform_indices = @transform_11, window_bounds = array<i64: 1, 32>}, {pipeline_mode = #tpu.pipeline_mode<synchronous>, transform_indices = @transform_12, window_bounds = array<i64: 32, 128>}, {pipeline_mode = #tpu.pipeline_mode<synchronous>, transform_indices = @transform_13, window_bounds = array<i64: 1, 128>}, {pipeline_mode = #tpu.pipeline_mode<synchronous>, transform_indices = @transform_14, window_bounds = array<i64: 128, 32>}, {pipeline_mode = #tpu.pipeline_mode<synchronous>, transform_indices = @transform_15, window_bounds = array<i64: 1, 32>}, {pipeline_mode = #tpu.pipeline_mode<synchronous>, transform_indices = @transform_16, window_bounds = array<i64: 1, 32>}, {pipeline_mode = #tpu.pipeline_mode<synchronous>, transform_indices = @transform_17, window_bounds = array<i64: 1, 32>}, {pipeline_mode = #tpu.pipeline_mode<synchronous>, transform_indices = @transform_18, window_bounds = array<i64: 32, 32>}, {pipeline_mode = #tpu.pipeline_mode<synchronous>, transform_indices = @transform_19, window_bounds = array<i64: 1, 32>}, {pipeline_mode = #tpu.pipeline_mode<synchronous>, transform_indices = @transform_20, window_bounds = array<i64: 32, 24>}, {pipeline_mode = #tpu.pipeline_mode<synchronous>, transform_indices = @transform_21, window_bounds = array<i64: 1, 24>}, {pipeline_mode = #tpu.pipeline_mode<synchronous>, transform_indices = @transform_22, window_bounds = array<i64: 2, 1>}, {pipeline_mode = #tpu.pipeline_mode<synchronous>, transform_indices = @transform_23, window_bounds = array<i64: 2, 1>}, {pipeline_mode = #tpu.pipeline_mode<synchronous>, transform_indices = @transform_24, window_bounds = array<i64: 2, 16>}, {pipeline_mode = #tpu.pipeline_mode<synchronous>, transform_indices = @transform_25, window_bounds = array<i64: 2, 8>}, {pipeline_mode = #tpu.pipeline_mode<synchronous>, transform_indices = @transform_26, window_bounds = array<i64: 1, 1>}]} {
    %c0 = arith.constant 0 : index
    %c0_0 = arith.constant 0 : index
    %0 = vector.load %arg1[%c0, %c0_0] : memref<2x8xi32, #tpu.memory_space<vmem>>, vector<2x8xi32>
    %1 = tpu.iota {dimensions = array<i32: 2>} : vector<2x8x64xi32>
    %2 = vector.shape_cast %0 : vector<2x8xi32> to vector<2x8x1xi32>
    %3 = vector.broadcast %2 : vector<2x8x1xi32> to vector<2x8x64xi32>
    %4 = arith.cmpi eq, %1, %3 : vector<2x8x64xi32>
    %5 = arith.extui %4 : vector<2x8x64xi1> to vector<2x8x64xi32>
    %6 = arith.sitofp %5 : vector<2x8x64xi32> to vector<2x8x64xf32>
    %7 = vector.shape_cast %6 : vector<2x8x64xf32> to vector<16x64xf32>
    %c0_1 = arith.constant 0 : index
    %c0_2 = arith.constant 0 : index
    %8 = vector.load %arg3[%c0_1, %c0_2] : memref<64x32xf32, #tpu.memory_space<vmem>>, vector<64x32xf32>
    %cst = arith.constant dense<0.000000e+00> : vector<16x32xf32>
    %9 = tpu.matmul %7, %8, %cst {dimension_numbers = #tpu.dot_dimension_numbers<[1], [0], [0], [1], [0, 0, 1, 1], [], []>} : vector<16x64xf32>, vector<64x32xf32>, vector<16x32xf32> -> vector<16x32xf32>
    %c0_3 = arith.constant 0 : index
    %c0_4 = arith.constant 0 : index
    %10 = vector.load %arg4[%c0_3, %c0_4] : memref<16x32xf32, #tpu.memory_space<vmem>>, vector<16x32xf32>
    %11 = vector.extract_strided_slice %10 {offsets = [0, 0], sizes = [8, 32], strides = [1, 1]} : vector<16x32xf32> to vector<8x32xf32>
    %12 = vector.shape_cast %9 : vector<16x32xf32> to vector<2x8x32xf32>
    %13 = vector.shape_cast %11 : vector<8x32xf32> to vector<1x8x32xf32>
    %14 = vector.broadcast %13 : vector<1x8x32xf32> to vector<2x8x32xf32>
    %15 = arith.addf %12, %14 : vector<2x8x32xf32>
    %16 = vector.shape_cast %15 : vector<2x8x32xf32> to vector<16x32xf32>
    %c0_5 = arith.constant 0 : index
    %c0_6 = arith.constant 0 : index
    %17 = vector.load %arg5[%c0_5, %c0_6] : memref<1x32xf32, #tpu.memory_space<vmem>>, vector<1x32xf32>
    %c0_7 = arith.constant 0 : index
    %c0_8 = arith.constant 0 : index
    %18 = vector.load %arg6[%c0_7, %c0_8] : memref<1x32xf32, #tpu.memory_space<vmem>>, vector<1x32xf32>
    %cst_9 = arith.constant dense<0.000000e+00> : vector<16xf32>
    %19 = vector.multi_reduction <add>, %16, %cst_9 [1] : vector<16x32xf32> to vector<16xf32>
    %20 = vector.shape_cast %19 : vector<16xf32> to vector<16x1xf32>
    %cst_10 = arith.constant 3.200000e+01 : f32
    %21 = vector.broadcast %cst_10 : f32 to vector<16x1xf32>
    %22 = arith.divf %20, %21 : vector<16x1xf32>
    %23 = vector.broadcast %22 : vector<16x1xf32> to vector<16x32xf32>
    %24 = arith.subf %16, %23 : vector<16x32xf32>
    %25 = arith.mulf %24, %24 : vector<16x32xf32>
    %cst_11 = arith.constant dense<0.000000e+00> : vector<16xf32>
    %26 = vector.multi_reduction <add>, %25, %cst_11 [1] : vector<16x32xf32> to vector<16xf32>
    %27 = vector.shape_cast %26 : vector<16xf32> to vector<16x1xf32>
    %cst_12 = arith.constant 3.200000e+01 : f32
    %28 = vector.broadcast %cst_12 : f32 to vector<16x1xf32>
    %29 = arith.divf %27, %28 : vector<16x1xf32>
    %30 = vector.broadcast %22 : vector<16x1xf32> to vector<16x32xf32>
    %31 = arith.subf %16, %30 : vector<16x32xf32>
    %cst_13 = arith.constant 9.99999996E-13 : f32
    %32 = vector.broadcast %cst_13 : f32 to vector<16x1xf32>
    %33 = arith.addf %29, %32 : vector<16x1xf32>
    %34 = math.rsqrt %33 : vector<16x1xf32>
    %35 = vector.broadcast %34 : vector<16x1xf32> to vector<16x32xf32>
    %36 = arith.mulf %31, %35 : vector<16x32xf32>
    %37 = vector.broadcast %17 : vector<1x32xf32> to vector<16x32xf32>
    %38 = arith.mulf %36, %37 : vector<16x32xf32>
    %39 = vector.broadcast %18 : vector<1x32xf32> to vector<16x32xf32>
    %40 = arith.addf %38, %39 : vector<16x32xf32>
    %c0_14 = arith.constant 0 : index
    %c0_15 = arith.constant 0 : index
    %41 = vector.load %arg7[%c0_14, %c0_15] : memref<32x96xf32, #tpu.memory_space<vmem>>, vector<32x96xf32>
    %cst_16 = arith.constant dense<0.000000e+00> : vector<16x96xf32>
    %42 = tpu.matmul %40, %41, %cst_16 {dimension_numbers = #tpu.dot_dimension_numbers<[1], [0], [0], [1], [0, 0, 1, 1], [], []>} : vector<16x32xf32>, vector<32x96xf32>, vector<16x96xf32> -> vector<16x96xf32>
    %c0_17 = arith.constant 0 : index
    %c0_18 = arith.constant 0 : index
    %43 = vector.load %arg8[%c0_17, %c0_18] : memref<1x96xf32, #tpu.memory_space<vmem>>, vector<1x96xf32>
    %44 = vector.broadcast %43 : vector<1x96xf32> to vector<16x96xf32>
    %45 = arith.addf %42, %44 : vector<16x96xf32>
    %46 = vector.extract_strided_slice %45 {offsets = [0, 0], sizes = [16, 32], strides = [1, 1]} : vector<16x96xf32> to vector<16x32xf32>
    %47 = vector.shape_cast %46 : vector<16x32xf32> to vector<2x8x32xf32>
    %48 = vector.extract_strided_slice %45 {offsets = [0, 32], sizes = [16, 32], strides = [1, 1]} : vector<16x96xf32> to vector<16x32xf32>
    %49 = vector.shape_cast %48 : vector<16x32xf32> to vector<2x8x32xf32>
    %50 = vector.extract_strided_slice %45 {offsets = [0, 64], sizes = [16, 32], strides = [1, 1]} : vector<16x96xf32> to vector<16x32xf32>
    %51 = vector.shape_cast %50 : vector<16x32xf32> to vector<2x8x32xf32>
    %c0_19 = arith.constant 0 : index
    %c0_20 = arith.constant 0 : index
    %52 = vector.load %arg2[%c0_19, %c0_20] : memref<2x8xi32, #tpu.memory_space<vmem>>, vector<2x8xi32>
    %53 = arith.sitofp %52 : vector<2x8xi32> to vector<2x8xf32>
    %cst_21 = arith.constant 1.000000e+00 : f32
    %54 = vector.broadcast %cst_21 : f32 to vector<2x8xf32>
    %55 = arith.subf %54, %53 : vector<2x8xf32>
    %cst_22 = arith.constant -1.000000e+09 : f32
    %56 = vector.broadcast %cst_22 : f32 to vector<2x8xf32>
    %57 = arith.mulf %55, %56 : vector<2x8xf32>
    "tpu.trace_start"() <{level = 10 : i32, message = "bqd,bkd->bqk"}> : () -> ()
    %cst_23 = arith.constant dense<0.000000e+00> : vector<2x8x8xf32>
    %58 = tpu.matmul %47, %49, %cst_23 {dimension_numbers = #tpu.dot_dimension_numbers<[2], [2], [1], [1], [0, 0, 0, 1, 1, 1], [0], [0]>} : vector<2x8x32xf32>, vector<2x8x32xf32>, vector<2x8x8xf32> -> vector<2x8x8xf32>
    "tpu.trace_stop"() : () -> ()
    %cst_24 = arith.constant 0.176776692 : f32
    %59 = vector.broadcast %cst_24 : f32 to vector<2x8x8xf32>
    %60 = arith.mulf %58, %59 : vector<2x8x8xf32>
    %61 = vector.shape_cast %57 : vector<2x8xf32> to vector<2x1x8xf32>
    %62 = vector.broadcast %61 : vector<2x1x8xf32> to vector<2x8x8xf32>
    %63 = arith.addf %60, %62 : vector<2x8x8xf32>
    %cst_25 = arith.constant dense<0xFF800000> : vector<2x8xf32>
    %64 = vector.multi_reduction <maximumf>, %63, %cst_25 [2] : vector<2x8x8xf32> to vector<2x8xf32>
    %65 = vector.shape_cast %64 : vector<2x8xf32> to vector<2x8x1xf32>
    %66 = vector.broadcast %65 : vector<2x8x1xf32> to vector<2x8x8xf32>
    %67 = arith.subf %63, %66 : vector<2x8x8xf32>
    %68 = math.exp %67 : vector<2x8x8xf32>
    %cst_26 = arith.constant dense<0.000000e+00> : vector<2x8xf32>
    %69 = vector.multi_reduction <add>, %68, %cst_26 [2] : vector<2x8x8xf32> to vector<2x8xf32>
    %70 = vector.shape_cast %69 : vector<2x8xf32> to vector<2x8x1xf32>
    %71 = vector.broadcast %70 : vector<2x8x1xf32> to vector<2x8x8xf32>
    %72 = arith.divf %68, %71 : vector<2x8x8xf32>
    "tpu.trace_start"() <{level = 10 : i32, message = "bqk,bkd->bqd"}> : () -> ()
    %cst_27 = arith.constant dense<0.000000e+00> : vector<2x8x32xf32>
    %73 = tpu.matmul %72, %51, %cst_27 {dimension_numbers = #tpu.dot_dimension_numbers<[2], [1], [1], [2], [0, 0, 0, 1, 1, 2], [0], [0]>} : vector<2x8x8xf32>, vector<2x8x32xf32>, vector<2x8x32xf32> -> vector<2x8x32xf32>
    "tpu.trace_stop"() : () -> ()
    %74 = vector.shape_cast %73 : vector<2x8x32xf32> to vector<16x32xf32>
    %c0_28 = arith.constant 0 : index
    %c0_29 = arith.constant 0 : index
    %75 = vector.load %arg9[%c0_28, %c0_29] : memref<32x32xf32, #tpu.memory_space<vmem>>, vector<32x32xf32>
    %cst_30 = arith.constant dense<0.000000e+00> : vector<16x32xf32>
    %76 = tpu.matmul %74, %75, %cst_30 {dimension_numbers = #tpu.dot_dimension_numbers<[1], [0], [0], [1], [0, 0, 1, 1], [], []>} : vector<16x32xf32>, vector<32x32xf32>, vector<16x32xf32> -> vector<16x32xf32>
    %c0_31 = arith.constant 0 : index
    %c0_32 = arith.constant 0 : index
    %77 = vector.load %arg10[%c0_31, %c0_32] : memref<1x32xf32, #tpu.memory_space<vmem>>, vector<1x32xf32>
    %78 = vector.broadcast %77 : vector<1x32xf32> to vector<16x32xf32>
    %79 = arith.addf %76, %78 : vector<16x32xf32>
    %80 = arith.addf %40, %79 : vector<16x32xf32>
    %c0_33 = arith.constant 0 : index
    %c0_34 = arith.constant 0 : index
    %81 = vector.load %arg11[%c0_33, %c0_34] : memref<1x32xf32, #tpu.memory_space<vmem>>, vector<1x32xf32>
    %c0_35 = arith.constant 0 : index
    %c0_36 = arith.constant 0 : index
    %82 = vector.load %arg12[%c0_35, %c0_36] : memref<1x32xf32, #tpu.memory_space<vmem>>, vector<1x32xf32>
    %cst_37 = arith.constant dense<0.000000e+00> : vector<16xf32>
    %83 = vector.multi_reduction <add>, %80, %cst_37 [1] : vector<16x32xf32> to vector<16xf32>
    %84 = vector.shape_cast %83 : vector<16xf32> to vector<16x1xf32>
    %cst_38 = arith.constant 3.200000e+01 : f32
    %85 = vector.broadcast %cst_38 : f32 to vector<16x1xf32>
    %86 = arith.divf %84, %85 : vector<16x1xf32>
    %87 = vector.broadcast %86 : vector<16x1xf32> to vector<16x32xf32>
    %88 = arith.subf %80, %87 : vector<16x32xf32>
    %89 = arith.mulf %88, %88 : vector<16x32xf32>
    %cst_39 = arith.constant dense<0.000000e+00> : vector<16xf32>
    %90 = vector.multi_reduction <add>, %89, %cst_39 [1] : vector<16x32xf32> to vector<16xf32>
    %91 = vector.shape_cast %90 : vector<16xf32> to vector<16x1xf32>
    %cst_40 = arith.constant 3.200000e+01 : f32
    %92 = vector.broadcast %cst_40 : f32 to vector<16x1xf32>
    %93 = arith.divf %91, %92 : vector<16x1xf32>
    %94 = vector.broadcast %86 : vector<16x1xf32> to vector<16x32xf32>
    %95 = arith.subf %80, %94 : vector<16x32xf32>
    %cst_41 = arith.constant 9.99999996E-13 : f32
    %96 = vector.broadcast %cst_41 : f32 to vector<16x1xf32>
    %97 = arith.addf %93, %96 : vector<16x1xf32>
    %98 = math.rsqrt %97 : vector<16x1xf32>
    %99 = vector.broadcast %98 : vector<16x1xf32> to vector<16x32xf32>
    %100 = arith.mulf %95, %99 : vector<16x32xf32>
    %101 = vector.broadcast %81 : vector<1x32xf32> to vector<16x32xf32>
    %102 = arith.mulf %100, %101 : vector<16x32xf32>
    %103 = vector.broadcast %82 : vector<1x32xf32> to vector<16x32xf32>
    %104 = arith.addf %102, %103 : vector<16x32xf32>
    %c0_42 = arith.constant 0 : index
    %c0_43 = arith.constant 0 : index
    %105 = vector.load %arg13[%c0_42, %c0_43] : memref<32x128xf32, #tpu.memory_space<vmem>>, vector<32x128xf32>
    %cst_44 = arith.constant dense<0.000000e+00> : vector<16x128xf32>
    %106 = tpu.matmul %104, %105, %cst_44 {dimension_numbers = #tpu.dot_dimension_numbers<[1], [0], [0], [1], [0, 0, 1, 1], [], []>} : vector<16x32xf32>, vector<32x128xf32>, vector<16x128xf32> -> vector<16x128xf32>
    %c0_45 = arith.constant 0 : index
    %c0_46 = arith.constant 0 : index
    %107 = vector.load %arg14[%c0_45, %c0_46] : memref<1x128xf32, #tpu.memory_space<vmem>>, vector<1x128xf32>
    %108 = vector.broadcast %107 : vector<1x128xf32> to vector<16x128xf32>
    %109 = arith.addf %106, %108 : vector<16x128xf32>
    %cst_47 = arith.constant 5.000000e-01 : f32
    %110 = vector.broadcast %cst_47 : f32 to vector<16x128xf32>
    %111 = arith.mulf %110, %109 : vector<16x128xf32>
    %cst_48 = arith.constant 4.471500e-02 : f32
    %112 = vector.broadcast %cst_48 : f32 to vector<16x128xf32>
    %113 = arith.mulf %112, %109 : vector<16x128xf32>
    %114 = arith.mulf %113, %109 : vector<16x128xf32>
    %115 = arith.mulf %114, %109 : vector<16x128xf32>
    %116 = arith.addf %109, %115 : vector<16x128xf32>
    %cst_49 = arith.constant 0.797884583 : f32
    %117 = vector.broadcast %cst_49 : f32 to vector<16x128xf32>
    %118 = arith.mulf %117, %116 : vector<16x128xf32>
    %119 = math.tanh %118 : vector<16x128xf32>
    %cst_50 = arith.constant 1.000000e+00 : f32
    %120 = vector.broadcast %cst_50 : f32 to vector<16x128xf32>
    %121 = arith.addf %120, %119 : vector<16x128xf32>
    %122 = arith.mulf %111, %121 : vector<16x128xf32>
    %c0_51 = arith.constant 0 : index
    %c0_52 = arith.constant 0 : index
    %123 = vector.load %arg15[%c0_51, %c0_52] : memref<128x32xf32, #tpu.memory_space<vmem>>, vector<128x32xf32>
    %cst_53 = arith.constant dense<0.000000e+00> : vector<16x32xf32>
    %124 = tpu.matmul %122, %123, %cst_53 {dimension_numbers = #tpu.dot_dimension_numbers<[1], [0], [0], [1], [0, 0, 1, 1], [], []>} : vector<16x128xf32>, vector<128x32xf32>, vector<16x32xf32> -> vector<16x32xf32>
    %c0_54 = arith.constant 0 : index
    %c0_55 = arith.constant 0 : index
    %125 = vector.load %arg16[%c0_54, %c0_55] : memref<1x32xf32, #tpu.memory_space<vmem>>, vector<1x32xf32>
    %126 = vector.broadcast %125 : vector<1x32xf32> to vector<16x32xf32>
    %127 = arith.addf %124, %126 : vector<16x32xf32>
    %128 = arith.addf %104, %127 : vector<16x32xf32>
    %c0_56 = arith.constant 0 : index
    %c0_57 = arith.constant 0 : index
    %129 = vector.load %arg17[%c0_56, %c0_57] : memref<1x32xf32, #tpu.memory_space<vmem>>, vector<1x32xf32>
    %c0_58 = arith.constant 0 : index
    %c0_59 = arith.constant 0 : index
    %130 = vector.load %arg18[%c0_58, %c0_59] : memref<1x32xf32, #tpu.memory_space<vmem>>, vector<1x32xf32>
    %cst_60 = arith.constant dense<0.000000e+00> : vector<16xf32>
    %131 = vector.multi_reduction <add>, %128, %cst_60 [1] : vector<16x32xf32> to vector<16xf32>
    %132 = vector.shape_cast %131 : vector<16xf32> to vector<16x1xf32>
    %cst_61 = arith.constant 3.200000e+01 : f32
    %133 = vector.broadcast %cst_61 : f32 to vector<16x1xf32>
    %134 = arith.divf %132, %133 : vector<16x1xf32>
    %135 = vector.broadcast %134 : vector<16x1xf32> to vector<16x32xf32>
    %136 = arith.subf %128, %135 : vector<16x32xf32>
    %137 = arith.mulf %136, %136 : vector<16x32xf32>
    %cst_62 = arith.constant dense<0.000000e+00> : vector<16xf32>
    %138 = vector.multi_reduction <add>, %137, %cst_62 [1] : vector<16x32xf32> to vector<16xf32>
    %139 = vector.shape_cast %138 : vector<16xf32> to vector<16x1xf32>
    %cst_63 = arith.constant 3.200000e+01 : f32
    %140 = vector.broadcast %cst_63 : f32 to vector<16x1xf32>
    %141 = arith.divf %139, %140 : vector<16x1xf32>
    %142 = vector.broadcast %134 : vector<16x1xf32> to vector<16x32xf32>
    %143 = arith.subf %128, %142 : vector<16x32xf32>
    %cst_64 = arith.constant 9.99999996E-13 : f32
    %144 = vector.broadcast %cst_64 : f32 to vector<16x1xf32>
    %145 = arith.addf %141, %144 : vector<16x1xf32>
    %146 = math.rsqrt %145 : vector<16x1xf32>
    %147 = vector.broadcast %146 : vector<16x1xf32> to vector<16x32xf32>
    %148 = arith.mulf %143, %147 : vector<16x32xf32>
    %149 = vector.broadcast %129 : vector<1x32xf32> to vector<16x32xf32>
    %150 = arith.mulf %148, %149 : vector<16x32xf32>
    %151 = vector.broadcast %130 : vector<1x32xf32> to vector<16x32xf32>
    %152 = arith.addf %150, %151 : vector<16x32xf32>
    %153 = vector.shape_cast %152 : vector<16x32xf32> to vector<2x8x32xf32>
    %154 = vector.extract_strided_slice %153 {offsets = [0, 0, 0], sizes = [2, 1, 32], strides = [1, 1, 1]} : vector<2x8x32xf32> to vector<2x1x32xf32>
    %155 = vector.shape_cast %154 : vector<2x1x32xf32> to vector<2x32xf32>
    %c0_65 = arith.constant 0 : index
    %c0_66 = arith.constant 0 : index
    %156 = vector.load %arg19[%c0_65, %c0_66] : memref<32x32xf32, #tpu.memory_space<vmem>>, vector<32x32xf32>
    %cst_67 = arith.constant dense<0.000000e+00> : vector<2x32xf32>
    %157 = tpu.matmul %155, %156, %cst_67 {dimension_numbers = #tpu.dot_dimension_numbers<[1], [0], [0], [1], [0, 0, 1, 1], [], []>} : vector<2x32xf32>, vector<32x32xf32>, vector<2x32xf32> -> vector<2x32xf32>
    %c0_68 = arith.constant 0 : index
    %c0_69 = arith.constant 0 : index
    %158 = vector.load %arg20[%c0_68, %c0_69] : memref<1x32xf32, #tpu.memory_space<vmem>>, vector<1x32xf32>
    %159 = vector.broadcast %158 : vector<1x32xf32> to vector<2x32xf32>
    %160 = arith.addf %157, %159 : vector<2x32xf32>
    %cst_70 = arith.constant 5.000000e-01 : f32
    %161 = vector.broadcast %cst_70 : f32 to vector<2x32xf32>
    %162 = arith.mulf %161, %160 : vector<2x32xf32>
    %cst_71 = arith.constant 4.471500e-02 : f32
    %163 = vector.broadcast %cst_71 : f32 to vector<2x32xf32>
    %164 = arith.mulf %163, %160 : vector<2x32xf32>
    %165 = arith.mulf %164, %160 : vector<2x32xf32>
    %166 = arith.mulf %165, %160 : vector<2x32xf32>
    %167 = arith.addf %160, %166 : vector<2x32xf32>
    %cst_72 = arith.constant 0.797884583 : f32
    %168 = vector.broadcast %cst_72 : f32 to vector<2x32xf32>
    %169 = arith.mulf %168, %167 : vector<2x32xf32>
    %170 = math.tanh %169 : vector<2x32xf32>
    %cst_73 = arith.constant 1.000000e+00 : f32
    %171 = vector.broadcast %cst_73 : f32 to vector<2x32xf32>
    %172 = arith.addf %171, %170 : vector<2x32xf32>
    %173 = arith.mulf %162, %172 : vector<2x32xf32>
    %c0_74 = arith.constant 0 : index
    %c0_75 = arith.constant 0 : index
    %174 = vector.load %arg21[%c0_74, %c0_75] : memref<32x24xf32, #tpu.memory_space<vmem>>, vector<32x24xf32>
    %cst_76 = arith.constant dense<0.000000e+00> : vector<2x24xf32>
    %175 = tpu.matmul %173, %174, %cst_76 {dimension_numbers = #tpu.dot_dimension_numbers<[1], [0], [0], [1], [0, 0, 1, 1], [], []>} : vector<2x32xf32>, vector<32x24xf32>, vector<2x24xf32> -> vector<2x24xf32>
    %c0_77 = arith.constant 0 : index
    %c0_78 = arith.constant 0 : index
    %176 = vector.load %arg22[%c0_77, %c0_78] : memref<1x24xf32, #tpu.memory_space<vmem>>, vector<1x24xf32>
    %177 = vector.broadcast %176 : vector<1x24xf32> to vector<2x24xf32>
    %178 = arith.addf %175, %177 : vector<2x24xf32>
    %179 = vector.extract_strided_slice %178 {offsets = [0, 0], sizes = [2, 16], strides = [1, 1]} : vector<2x24xf32> to vector<2x16xf32>
    %180 = vector.extract_strided_slice %178 {offsets = [0, 16], sizes = [2, 8], strides = [1, 1]} : vector<2x24xf32> to vector<2x8xf32>
    %c0_79 = arith.constant 0 : index
    %c0_80 = arith.constant 0 : index
    %181 = vector.load %arg25[%c0_79, %c0_80] : memref<2x16xf32, #tpu.memory_space<vmem>>, vector<2x16xf32>
    tpu.vector_store %arg25[%c0_79, %c0_80], %179 {strides = array<i32>} : memref<2x16xf32, #tpu.memory_space<vmem>>, vector<2x16xf32>,
    %c0_81 = arith.constant 0 : index
    %c0_82 = arith.constant 0 : index
    %182 = vector.load %arg26[%c0_81, %c0_82] : memref<2x8xf32, #tpu.memory_space<vmem>>, vector<2x8xf32>
    tpu.vector_store %arg26[%c0_81, %c0_82], %180 {strides = array<i32>} : memref<2x8xf32, #tpu.memory_space<vmem>>, vector<2x8xf32>,
    %c0_83 = arith.constant 0 : index
    %c0_84 = arith.constant 0 : index
    %183 = vector.load %arg23[%c0_83, %c0_84] : memref<2x1xi32, #tpu.memory_space<vmem>>, vector<2x1xi32>
    %cst_85 = arith.constant dense<0xFF800000> : vector<2xf32>
    %184 = vector.multi_reduction <maximumf>, %179, %cst_85 [1] : vector<2x16xf32> to vector<2xf32>
    %185 = vector.shape_cast %184 : vector<2xf32> to vector<2x1xf32>
    %186 = vector.broadcast %185 : vector<2x1xf32> to vector<2x16xf32>
    %187 = arith.subf %179, %186 : vector<2x16xf32>
    %188 = math.exp %187 : vector<2x16xf32>
    %cst_86 = arith.constant dense<0.000000e+00> : vector<2xf32>
    %189 = vector.multi_reduction <add>, %188, %cst_86 [1] : vector<2x16xf32> to vector<2xf32>
    %190 = vector.shape_cast %189 : vector<2xf32> to vector<2x1xf32>
    %191 = math.log %190 : vector<2x1xf32>
    %192 = arith.addf %191, %185 : vector<2x1xf32>
    %193 = tpu.iota {dimensions = array<i32: 1>} : vector<2x16xi32>
    %194 = vector.broadcast %183 : vector<2x1xi32> to vector<2x16xi32>
    %195 = arith.cmpi eq, %193, %194 : vector<2x16xi32>
    %196 = arith.extui %195 : vector<2x16xi1> to vector<2x16xi32>
    %197 = arith.sitofp %196 : vector<2x16xi32> to vector<2x16xf32>
    %198 = arith.mulf %179, %197 : vector<2x16xf32>
    %cst_87 = arith.constant dense<0.000000e+00> : vector<2xf32>
    %199 = vector.multi_reduction <add>, %198, %cst_87 [1] : vector<2x16xf32> to vector<2xf32>
    %200 = vector.shape_cast %199 : vector<2xf32> to vector<2x1xf32>
    %201 = arith.subf %192, %200 : vector<2x1xf32>
    %202 = vector.shape_cast %201 : vector<2x1xf32> to vector<1x2x1xf32>
    %cst_88 = arith.constant dense<0.000000e+00> : vector<1xf32>
    %203 = vector.multi_reduction <add>, %202, %cst_88 [1, 2] : vector<1x2x1xf32> to vector<1xf32>
    %204 = vector.shape_cast %203 : vector<1xf32> to vector<1x1x1xf32>
    %205 = vector.extract %204[0, 0, 0] : f32 from vector<1x1x1xf32>
    %206 = vector.broadcast %205 : f32 to vector<1x1xf32>
    %c0_89 = arith.constant 0 : index
    %c0_90 = arith.constant 0 : index
    %207 = vector.load %arg24[%c0_89, %c0_90] : memref<2x1xi32, #tpu.memory_space<vmem>>, vector<2x1xi32>
    %cst_91 = arith.constant dense<0xFF800000> : vector<2xf32>
    %208 = vector.multi_reduction <maximumf>, %180, %cst_91 [1] : vector<2x8xf32> to vector<2xf32>
    %209 = vector.shape_cast %208 : vector<2xf32> to vector<2x1xf32>
    %210 = vector.broadcast %209 : vector<2x1xf32> to vector<2x8xf32>
    %211 = arith.subf %180, %210 : vector<2x8xf32>
    %212 = math.exp %211 : vector<2x8xf32>
    %cst_92 = arith.constant dense<0.000000e+00> : vector<2xf32>
    %213 = vector.multi_reduction <add>, %212, %cst_92 [1] : vector<2x8xf32> to vector<2xf32>
    %214 = vector.shape_cast %213 : vector<2xf32> to vector<2x1xf32>
    %215 = math.log %214 : vector<2x1xf32>
    %216 = arith.addf %215, %209 : vector<2x1xf32>
    %217 = tpu.iota {dimensions = array<i32: 1>} : vector<2x8xi32>
    %218 = vector.broadcast %207 : vector<2x1xi32> to vector<2x8xi32>
    %219 = arith.cmpi eq, %217, %218 : vector<2x8xi32>
    %220 = arith.extui %219 : vector<2x8xi1> to vector<2x8xi32>
    %221 = arith.sitofp %220 : vector<2x8xi32> to vector<2x8xf32>
    %222 = arith.mulf %180, %221 : vector<2x8xf32>
    %cst_93 = arith.constant dense<0.000000e+00> : vector<2xf32>
    %223 = vector.multi_reduction <add>, %222, %cst_93 [1] : vector<2x8xf32> to vector<2xf32>
    %224 = vector.shape_cast %223 : vector<2xf32> to vector<2x1xf32>
    %225 = arith.subf %216, %224 : vector<2x1xf32>
    %226 = vector.shape_cast %225 : vector<2x1xf32> to vector<1x2x1xf32>
    %cst_94 = arith.constant dense<0.000000e+00> : vector<1xf32>
    %227 = vector.multi_reduction <add>, %226, %cst_94 [1, 2] : vector<1x2x1xf32> to vector<1xf32>
    %228 = vector.shape_cast %227 : vector<1xf32> to vector<1x1x1xf32>
    %229 = vector.extract %228[0, 0, 0] : f32 from vector<1x1x1xf32>
    %230 = vector.broadcast %229 : f32 to vector<1x1xf32>
    %231 = arith.addf %206, %230 : vector<1x1xf32>
    %cst_95 = arith.constant 5.000000e-01 : f32
    %232 = vector.broadcast %cst_95 : f32 to vector<1x1xf32>
    %233 = arith.mulf %231, %232 : vector<1x1xf32>
    %c0_96 = arith.constant 0 : index
    %c0_97 = arith.constant 0 : index
    %234 = vector.load %arg27[%c0_96, %c0_97] : memref<1x1xf32, #tpu.memory_space<vmem>>, vector<1x1xf32>
    tpu.vector_store %arg27[%c0_96, %c0_97], %233 {strides = array<i32>} : memref<1x1xf32, #tpu.memory_space<vmem>>, vector<1x1xf32>,
    return
  }
  func.func @transform_0(%arg0: i32) -> (i32, i32) {
    %c0_i32 = arith.constant 0 : i32
    %c0_i32_0 = arith.constant 0 : i32
    %c0_i32_1 = arith.constant 0 : i32
    return %c0_i32, %c0_i32_0 : i32, i32
  }
  func.func @transform_1(%arg0: i32) -> (i32, i32) {
    %c0_i32 = arith.constant 0 : i32
    %c0_i32_0 = arith.constant 0 : i32
    %c0_i32_1 = arith.constant 0 : i32
    return %c0_i32, %c0_i32_0 : i32, i32
  }
  func.func @transform_2(%arg0: i32) -> (i32, i32) {
    %c0_i32 = arith.constant 0 : i32
    %c0_i32_0 = arith.constant 0 : i32
    %c0_i32_1 = arith.constant 0 : i32
    return %c0_i32, %c0_i32_0 : i32, i32
  }
  func.func @transform_3(%arg0: i32) -> (i32, i32) {
    %c0_i32 = arith.constant 0 : i32
    %c0_i32_0 = arith.constant 0 : i32
    %c0_i32_1 = arith.constant 0 : i32
    return %c0_i32, %c0_i32_0 : i32, i32
  }
  func.func @transform_4(%arg0: i32) -> (i32, i32) {
    %c0_i32 = arith.constant 0 : i32
    %c0_i32_0 = arith.constant 0 : i32
    %c0_i32_1 = arith.constant 0 : i32
    return %c0_i32, %c0_i32_0 : i32, i32
  }
  func.func @transform_5(%arg0: i32) -> (i32, i32) {
    %c0_i32 = arith.constant 0 : i32
    %c0_i32_0 = arith.constant 0 : i32
    %c0_i32_1 = arith.constant 0 : i32
    return %c0_i32, %c0_i32_0 : i32, i32
  }
  func.func @transform_6(%arg0: i32) -> (i32, i32) {
    %c0_i32 = arith.constant 0 : i32
    %c0_i32_0 = arith.constant 0 : i32
    %c0_i32_1 = arith.constant 0 : i32
    return %c0_i32, %c0_i32_0 : i32, i32
  }
  func.func @transform_7(%arg0: i32) -> (i32, i32) {
    %c0_i32 = arith.constant 0 : i32
    %c0_i32_0 = arith.constant 0 : i32
    %c0_i32_1 = arith.constant 0 : i32
    return %c0_i32, %c0_i32_0 : i32, i32
  }
  func.func @transform_8(%arg0: i32) -> (i32, i32) {
    %c0_i32 = arith.constant 0 : i32
    %c0_i32_0 = arith.constant 0 : i32
    %c0_i32_1 = arith.constant 0 : i32
    return %c0_i32, %c0_i32_0 : i32, i32
  }
  func.func @transform_9(%arg0: i32) -> (i32, i32) {
    %c0_i32 = arith.constant 0 : i32
    %c0_i32_0 = arith.constant 0 : i32
    %c0_i32_1 = arith.constant 0 : i32
    return %c0_i32, %c0_i32_0 : i32, i32
  }
  func.func @transform_10(%arg0: i32) -> (i32, i32) {
    %c0_i32 = arith.constant 0 : i32
    %c0_i32_0 = arith.constant 0 : i32
    %c0_i32_1 = arith.constant 0 : i32
    return %c0_i32, %c0_i32_0 : i32, i32
  }
  func.func @transform_11(%arg0: i32) -> (i32, i32) {
    %c0_i32 = arith.constant 0 : i32
    %c0_i32_0 = arith.constant 0 : i32
    %c0_i32_1 = arith.constant 0 : i32
    return %c0_i32, %c0_i32_0 : i32, i32
  }
  func.func @transform_12(%arg0: i32) -> (i32, i32) {
    %c0_i32 = arith.constant 0 : i32
    %c0_i32_0 = arith.constant 0 : i32
    %c0_i32_1 = arith.constant 0 : i32
    return %c0_i32, %c0_i32_0 : i32, i32
  }
  func.func @transform_13(%arg0: i32) -> (i32, i32) {
    %c0_i32 = arith.constant 0 : i32
    %c0_i32_0 = arith.constant 0 : i32
    %c0_i32_1 = arith.constant 0 : i32
    return %c0_i32, %c0_i32_0 : i32, i32
  }
  func.func @transform_14(%arg0: i32) -> (i32, i32) {
    %c0_i32 = arith.constant 0 : i32
    %c0_i32_0 = arith.constant 0 : i32
    %c0_i32_1 = arith.constant 0 : i32
    return %c0_i32, %c0_i32_0 : i32, i32
  }
  func.func @transform_15(%arg0: i32) -> (i32, i32) {
    %c0_i32 = arith.constant 0 : i32
    %c0_i32_0 = arith.constant 0 : i32
    %c0_i32_1 = arith.constant 0 : i32
    return %c0_i32, %c0_i32_0 : i32, i32
  }
  func.func @transform_16(%arg0: i32) -> (i32, i32) {
    %c0_i32 = arith.constant 0 : i32
    %c0_i32_0 = arith.constant 0 : i32
    %c0_i32_1 = arith.constant 0 : i32
    return %c0_i32, %c0_i32_0 : i32, i32
  }
  func.func @transform_17(%arg0: i32) -> (i32, i32) {
    %c0_i32 = arith.constant 0 : i32
    %c0_i32_0 = arith.constant 0 : i32
    %c0_i32_1 = arith.constant 0 : i32
    return %c0_i32, %c0_i32_0 : i32, i32
  }
  func.func @transform_18(%arg0: i32) -> (i32, i32) {
    %c0_i32 = arith.constant 0 : i32
    %c0_i32_0 = arith.constant 0 : i32
    %c0_i32_1 = arith.constant 0 : i32
    return %c0_i32, %c0_i32_0 : i32, i32
  }
  func.func @transform_19(%arg0: i32) -> (i32, i32) {
    %c0_i32 = arith.constant 0 : i32
    %c0_i32_0 = arith.constant 0 : i32
    %c0_i32_1 = arith.constant 0 : i32
    return %c0_i32, %c0_i32_0 : i32, i32
  }
  func.func @transform_20(%arg0: i32) -> (i32, i32) {
    %c0_i32 = arith.constant 0 : i32
    %c0_i32_0 = arith.constant 0 : i32
    %c0_i32_1 = arith.constant 0 : i32
    return %c0_i32, %c0_i32_0 : i32, i32
  }
  func.func @transform_21(%arg0: i32) -> (i32, i32) {
    %c0_i32 = arith.constant 0 : i32
    %c0_i32_0 = arith.constant 0 : i32
    %c0_i32_1 = arith.constant 0 : i32
    return %c0_i32, %c0_i32_0 : i32, i32
  }
  func.func @transform_22(%arg0: i32) -> (i32, i32) {
    %c0_i32 = arith.constant 0 : i32
    %c0_i32_0 = arith.constant 0 : i32
    %c0_i32_1 = arith.constant 0 : i32
    return %c0_i32, %c0_i32_0 : i32, i32
  }
  func.func @transform_23(%arg0: i32) -> (i32, i32) {
    %c0_i32 = arith.constant 0 : i32
    %c0_i32_0 = arith.constant 0 : i32
    %c0_i32_1 = arith.constant 0 : i32
    return %c0_i32, %c0_i32_0 : i32, i32
  }
  func.func @transform_24(%arg0: i32) -> (i32, i32) {
    %c0_i32 = arith.constant 0 : i32
    %c0_i32_0 = arith.constant 0 : i32
    %c0_i32_1 = arith.constant 0 : i32
    return %c0_i32, %c0_i32_0 : i32, i32
  }
  func.func @transform_25(%arg0: i32) -> (i32, i32) {
    %c0_i32 = arith.constant 0 : i32
    %c0_i32_0 = arith.constant 0 : i32
    %c0_i32_1 = arith.constant 0 : i32
    return %c0_i32, %c0_i32_0 : i32, i32
  }
  func.func @transform_26(%arg0: i32) -> (i32, i32) {
    %c0_i32 = arith.constant 0 : i32
    %c0_i32_0 = arith.constant 0 : i32
    %c0_i32_1 = arith.constant 0 : i32
    return %c0_i32, %c0_i32_0 : i32, i32
  }
}

</mosaic_0001>

<llo_original>
// kernel: dual_classifier_forward.1
$region0: #{dual_classifier_forward.1}
  #allocation0 [shape = 'u32[]', space=smem, size = 0x4, offset = 0x4, fixed_abs, tag = 'smem constant byte address 0x4 - core index']
  #allocation1 [shape = 'u32[144,128]{1,0:T(1,128)}', space=vmem, size = 0x12000, scoped, tag = 'internal scratch']
  %s0 = inlined_call_operand.vmem [shape: s32[2,8], index: 0, kind: input, shape index: {}]
  %s1 = inlined_call_operand.vmem [shape: s32[2,8], index: 1, kind: input, shape index: {}]
  %s2 = inlined_call_operand.vmem [shape: f32[64,32], index: 2, kind: input, shape index: {}]
  %s3 = inlined_call_operand.vmem [shape: f32[16,32], index: 3, kind: input, shape index: {}]
  %s4 = inlined_call_operand.vmem [shape: f32[1,32], index: 4, kind: input, shape index: {}]
  %s5 = inlined_call_operand.vmem [shape: f32[1,32], index: 5, kind: input, shape index: {}]
  %s6 = inlined_call_operand.vmem [shape: f32[32,96], index: 6, kind: input, shape index: {}]
  %s7 = inlined_call_operand.vmem [shape: f32[1,96], index: 7, kind: input, shape index: {}]
  %s8 = inlined_call_operand.vmem [shape: f32[32,32], index: 8, kind: input, shape index: {}]
  %s9 = inlined_call_operand.vmem [shape: f32[1,32], index: 9, kind: input, shape index: {}]
  %s10 = inlined_call_operand.vmem [shape: f32[1,32], index: 10, kind: input, shape index: {}]
  %s11 = inlined_call_operand.vmem [shape: f32[1,32], index: 11, kind: input, shape index: {}]
  %s12 = inlined_call_operand.vmem [shape: f32[32,128], index: 12, kind: input, shape index: {}]
  %s13 = inlined_call_operand.vmem [shape: f32[1,128], index: 13, kind: input, shape index: {}]
  %s14 = inlined_call_operand.vmem [shape: f32[128,32], index: 14, kind: input, shape index: {}]
  %s15 = inlined_call_operand.vmem [shape: f32[1,32], index: 15, kind: input, shape index: {}]
  %s16 = inlined_call_operand.vmem [shape: f32[1,32], index: 16, kind: input, shape index: {}]
  %s17 = inlined_call_operand.vmem [shape: f32[1,32], index: 17, kind: input, shape index: {}]
  %s18 = inlined_call_operand.vmem [shape: f32[32,32], index: 18, kind: input, shape index: {}]
  %s19 = inlined_call_operand.vmem [shape: f32[1,32], index: 19, kind: input, shape index: {}]
  %s20 = inlined_call_operand.vmem [shape: f32[32,24], index: 20, kind: input, shape index: {}]
  %s21 = inlined_call_operand.vmem [shape: f32[1,24], index: 21, kind: input, shape index: {}]
  %s22 = inlined_call_operand.vmem [shape: s32[2,1], index: 22, kind: input, shape index: {}]
  %s23 = inlined_call_operand.vmem [shape: s32[2,1], index: 23, kind: input, shape index: {}]
  %s24 = inlined_call_operand.hbm [shape: f32[2,16], index: 24, kind: output, shape index: {0}]
  %s25 = inlined_call_operand.hbm [shape: f32[2,8], index: 25, kind: output, shape index: {1}]
  %s26 = inlined_call_operand.hbm [shape: f32[1,1], index: 26, kind: output, shape index: {2}]
  %27 = xla_tuple %s24, %s25, %s26
  %s28 = sld [smem:[#allocation0]]
  $region122: #{dual_classifier_forward.1} parent=0
    _
  %s30 = ssub.s32 1, %s28
  %s31 = scalar_select 0, %s30, %s28
  $region1: #{dual_classifier_forward.1} parent=0
    #allocation2 [shape = 'u8[1024]{0}', space=vmem, size = 0x400, scoped, tag = 'output window, operand 0, single buffered']
    #allocation3 [shape = 's32[1]{0}', space=sflag, size = 0x4, scoped, tag = 'scoped memory for dual_classifier_forward.1']
    #allocation4 [shape = 'u8[1024]{0}', space=vmem, size = 0x400, scoped, tag = 'output window, operand 1, single buffered']
    #allocation5 [shape = 's32[1]{0}', space=sflag, size = 0x4, scoped, tag = 'scoped memory for dual_classifier_forward.1']
    #allocation6 [shape = 'u8[512]{0}', space=vmem, size = 0x400, scoped, tag = 'output window, operand 2, single buffered']
    %32 = vsyncpa [#allocation3], 0
    %33 = vsyncpa [#allocation5], 0
    // Predicated region
    $region2: #{dual_classifier_forward.1} parent=1 // pred_check
      _
    $region3: #{dual_classifier_forward.1} parent=1 // pred_check_branch
      %35 = sbr.rel (0) target = $region5
    $region4: #{dual_classifier_forward.1} parent=1 // pred_region
      _
    $region5: #{dual_classifier_forward.1} parent=1 // pred_fallthru
      _
    // Predicated region
    $region6: #{dual_classifier_forward.1} parent=1 // pred_check
      _
    $region7: #{dual_classifier_forward.1} parent=1 // pred_check_branch
      %37 = sbr.rel (0) target = $region9
    $region8: #{dual_classifier_forward.1} parent=1 // pred_region
      _
    $region9: #{dual_classifier_forward.1} parent=1 // pred_fallthru
      _
    // Predicated region
    $region10: #{dual_classifier_forward.1} parent=1 // pred_check
      _
    $region11: #{dual_classifier_forward.1} parent=1 // pred_check_branch
      %39 = sbr.rel (0) target = $region13
    $region12: #{dual_classifier_forward.1} parent=1 // pred_region
      _
    $region13: #{dual_classifier_forward.1} parent=1 // pred_fallthru
      _
    // Predicated region
    $region14: #{dual_classifier_forward.1} parent=1 // pred_check
      _
    $region15: #{dual_classifier_forward.1} parent=1 // pred_check_branch
      %41 = sbr.rel (0) target = $region17
    $region16: #{dual_classifier_forward.1} parent=1 // pred_region
      _
    $region17: #{dual_classifier_forward.1} parent=1 // pred_fallthru
      _
    // Predicated region
    $region18: #{dual_classifier_forward.1} parent=1 // pred_check
      _
    $region19: #{dual_classifier_forward.1} parent=1 // pred_check_branch
      %43 = sbr.rel (0) target = $region21
    $region20: #{dual_classifier_forward.1} parent=1 // pred_region
      _
    $region21: #{dual_classifier_forward.1} parent=1 // pred_fallthru
      _
    // Predicated region
    $region22: #{dual_classifier_forward.1} parent=1 // pred_check
      _
    $region23: #{dual_classifier_forward.1} parent=1 // pred_check_branch
      %45 = sbr.rel (0) target = $region25
    $region24: #{dual_classifier_forward.1} parent=1 // pred_region
      _
    $region25: #{dual_classifier_forward.1} parent=1 // pred_fallthru
      _
    // Predicated region
    $region26: #{dual_classifier_forward.1} parent=1 // pred_check
      _
    $region27: #{dual_classifier_forward.1} parent=1 // pred_check_branch
      %47 = sbr.rel (0) target = $region29
    $region28: #{dual_classifier_forward.1} parent=1 // pred_region
      _
    $region29: #{dual_classifier_forward.1} parent=1 // pred_fallthru
      _
    // Predicated region
    $region30: #{dual_classifier_forward.1} parent=1 // pred_check
      _
    $region31: #{dual_classifier_forward.1} parent=1 // pred_check_branch
      %49 = sbr.rel (0) target = $region33
    $region32: #{dual_classifier_forward.1} parent=1 // pred_region
      _
    $region33: #{dual_classifier_forward.1} parent=1 // pred_fallthru
      _
    // Predicated region
    $region34: #{dual_classifier_forward.1} parent=1 // pred_check
      _
    $region35: #{dual_classifier_forward.1} parent=1 // pred_check_branch
      %51 = sbr.rel (0) target = $region37
    $region36: #{dual_classifier_forward.1} parent=1 // pred_region
      _
    $region37: #{dual_classifier_forward.1} parent=1 // pred_fallthru
      _
    // Predicated region
    $region38: #{dual_classifier_forward.1} parent=1 // pred_check
      _
    $region39: #{dual_classifier_forward.1} parent=1 // pred_check_branch
      %53 = sbr.rel (0) target = $region41
    $region40: #{dual_classifier_forward.1} parent=1 // pred_region
      _
    $region41: #{dual_classifier_forward.1} parent=1 // pred_fallthru
      _
    // Predicated region
    $region42: #{dual_classifier_forward.1} parent=1 // pred_check
      _
    $region43: #{dual_classifier_forward.1} parent=1 // pred_check_branch
      %55 = sbr.rel (0) target = $region45
    $region44: #{dual_classifier_forward.1} parent=1 // pred_region
      _
    $region45: #{dual_classifier_forward.1} parent=1 // pred_fallthru
      _
    // Predicated region
    $region46: #{dual_classifier_forward.1} parent=1 // pred_check
      _
    $region47: #{dual_classifier_forward.1} parent=1 // pred_check_branch
      %57 = sbr.rel (0) target = $region49
    $region48: #{dual_classifier_forward.1} parent=1 // pred_region
      _
    $region49: #{dual_classifier_forward.1} parent=1 // pred_fallthru
      _
    // Predicated region
    $region50: #{dual_classifier_forward.1} parent=1 // pred_check
      _
    $region51: #{dual_classifier_forward.1} parent=1 // pred_check_branch
      %59 = sbr.rel (0) target = $region53
    $region52: #{dual_classifier_forward.1} parent=1 // pred_region
      _
    $region53: #{dual_classifier_forward.1} parent=1 // pred_fallthru
      _
    // Predicated region
    $region54: #{dual_classifier_forward.1} parent=1 // pred_check
      _
    $region55: #{dual_classifier_forward.1} parent=1 // pred_check_branch
      %61 = sbr.rel (0) target = $region57
    $region56: #{dual_classifier_forward.1} parent=1 // pred_region
      _
    $region57: #{dual_classifier_forward.1} parent=1 // pred_fallthru
      _
    // Predicated region
    $region58: #{dual_classifier_forward.1} parent=1 // pred_check
      _
    $region59: #{dual_classifier_forward.1} parent=1 // pred_check_branch
      %63 = sbr.rel (0) target = $region61
    $region60: #{dual_classifier_forward.1} parent=1 // pred_region
      _
    $region61: #{dual_classifier_forward.1} parent=1 // pred_fallthru
      _
    // Predicated region
    $region62: #{dual_classifier_forward.1} parent=1 // pred_check
      _
    $region63: #{dual_classifier_forward.1} parent=1 // pred_check_branch
      %65 = sbr.rel (0) target = $region65
    $region64: #{dual_classifier_forward.1} parent=1 // pred_region
      _
    $region65: #{dual_classifier_forward.1} parent=1 // pred_fallthru
      _
    // Predicated region
    $region66: #{dual_classifier_forward.1} parent=1 // pred_check
      _
    $region67: #{dual_classifier_forward.1} parent=1 // pred_check_branch
      %67 = sbr.rel (0) target = $region69
    $region68: #{dual_classifier_forward.1} parent=1 // pred_region
      _
    $region69: #{dual_classifier_forward.1} parent=1 // pred_fallthru
      _
    // Predicated region
    $region70: #{dual_classifier_forward.1} parent=1 // pred_check
      _
    $region71: #{dual_classifier_forward.1} parent=1 // pred_check_branch
      %69 = sbr.rel (0) target = $region73
    $region72: #{dual_classifier_forward.1} parent=1 // pred_region
      _
    $region73: #{dual_classifier_forward.1} parent=1 // pred_fallthru
      _
    // Predicated region
    $region74: #{dual_classifier_forward.1} parent=1 // pred_check
      _
    $region75: #{dual_classifier_forward.1} parent=1 // pred_check_branch
      %71 = sbr.rel (0) target = $region77
    $region76: #{dual_classifier_forward.1} parent=1 // pred_region
      _
    $region77: #{dual_classifier_forward.1} parent=1 // pred_fallthru
      _
    // Predicated region
    $region78: #{dual_classifier_forward.1} parent=1 // pred_check
      _
    $region79: #{dual_classifier_forward.1} parent=1 // pred_check_branch
      %73 = sbr.rel (0) target = $region81
    $region80: #{dual_classifier_forward.1} parent=1 // pred_region
      _
    $region81: #{dual_classifier_forward.1} parent=1 // pred_fallthru
      _
    // Predicated region
    $region82: #{dual_classifier_forward.1} parent=1 // pred_check
      _
    $region83: #{dual_classifier_forward.1} parent=1 // pred_check_branch
      %75 = sbr.rel (0) target = $region85
    $region84: #{dual_classifier_forward.1} parent=1 // pred_region
      _
    $region85: #{dual_classifier_forward.1} parent=1 // pred_fallthru
      _
    // Predicated region
    $region86: #{dual_classifier_forward.1} parent=1 // pred_check
      _
    $region87: #{dual_classifier_forward.1} parent=1 // pred_check_branch
      %77 = sbr.rel (0) target = $region89
    $region88: #{dual_classifier_forward.1} parent=1 // pred_region
      _
    $region89: #{dual_classifier_forward.1} parent=1 // pred_fallthru
      _
    // Predicated region
    $region90: #{dual_classifier_forward.1} parent=1 // pred_check
      _
    $region91: #{dual_classifier_forward.1} parent=1 // pred_check_branch
      %79 = sbr.rel (0) target = $region93
    $region92: #{dual_classifier_forward.1} parent=1 // pred_region
      _
    $region93: #{dual_classifier_forward.1} parent=1 // pred_fallthru
      _
    // Predicated region
    $region94: #{dual_classifier_forward.1} parent=1 // pred_check
      _
    $region95: #{dual_classifier_forward.1} parent=1 // pred_check_branch
      %81 = sbr.rel (0) target = $region97
    $region96: #{dual_classifier_forward.1} parent=1 // pred_region
      _
    $region97: #{dual_classifier_forward.1} parent=1 // pred_fallthru
      _
    %v82 = vld [vmem:[%s0] sm:$0x3]
    %v83 = vlaneseq
    %v84 = vand.u32 %v83, 127
    %v85 = vlaneseq
    %v86 = vshrl.u32 %v85, 7
    %v87 = vsub.s32 0, %v86
    %v88 = vrot.slane %v82, %v87
    %90 = vbcast.lane.b32.xlu0 %v88, 256
    %v91 = vpop.permute.xlu0 %90
    %v92 = vlaneseq
    %v93 = vshrl.u32 %v92, 7
    %v94 = vsub.s32 1, %v93
    %v95 = vrot.slane %v82, %v94
    %97 = vbcast.lane.b32.xlu0 %v95, 256
    %v98 = vpop.permute.xlu0 %97
    %vm99 = vcmp.eq.s32.totalorder %v84, %v91
    %vm100 = vcmp.eq.s32.totalorder %v84, %v98
    %v101 = vsel %vm99, 1, 0
    %v102 = vsel %vm100, 1, 0
    %v103 = vcvt.s32.f32 %v101
    %v104 = vcvt.s32.f32 %v102
    %v105 = vld [vmem:[%s2] sm:$0xff]
    %v106 = vld [vmem:[%s2 + $0x8] sm:$0xff]
    %v107 = vld [vmem:[%s2 + $0x10] sm:$0xff]
    %v108 = vld [vmem:[%s2 + $0x18] sm:$0xff]
    %v109 = vld [vmem:[%s2 + $0x20] sm:$0xff]
    %v110 = vld [vmem:[%s2 + $0x28] sm:$0xff]
    %v111 = vld [vmem:[%s2 + $0x30] sm:$0xff]
    %v112 = vld [vmem:[%s2 + $0x38] sm:$0xff]
    %vm113 = vcmask 523264
    %v115 = vsel %vm113, %v103, 0
    %v118 = vsel %vm113, %v104, 0
    %120 = vmatprep.subr.mxu0 0.0
    %121 = vmatpush1.msra.mxu0 %v105
    %122 = vmatprep.subr.mxu0 0.0
    %123 = vmatpush1.msra.mxu0 %v106
    %124 = vmatprep.subr.mxu0 0.0
    %125 = vmatpush1.msra.mxu0 %v107
    %126 = vmatprep.subr.mxu0 0.0
    %127 = vmatpush1.msra.mxu0 %v108
    %128 = vmatprep.subr.mxu0 0.0
    %129 = vmatpush1.msra.mxu0 %v109
    %130 = vmatprep.subr.mxu0 0.0
    %131 = vmatpush1.msra.mxu0 %v110
    %132 = vmatprep.subr.mxu0 0.0
    %133 = vmatpush1.msra.mxu0 %v111
    %134 = vmatprep.subr.mxu0 0.0
    %135 = vmatpush1.msra.mxu0 %v112
    %136 = vmatprep.subr.mxu0 0.0
    %137 = vmatpush1.msra.mxu0 0.0
    %138 = vmatprep.subr.mxu0 0.0
    %139 = vmatpush1.msra.mxu0 0.0
    %140 = vmatprep.subr.mxu0 0.0
    %141 = vmatpush1.msra.mxu0 0.0
    %142 = vmatprep.subr.mxu0 0.0
    %143 = vmatpush1.msra.mxu0 0.0
    %144 = vmatprep.subr.mxu0 0.0
    %145 = vmatpush1.msra.mxu0 0.0
    %146 = vmatprep.subr.mxu0 0.0
    %147 = vmatpush1.msra.mxu0 0.0
    %148 = vmatprep.subr.mxu0 0.0
    %149 = vmatpush1.msra.mxu0 0.0
    %150 = vmatprep.subr.mxu0 0.0
    %151 = vmatpush1.msra.mxu0 0.0
    %152 = vmatprep.subr.mxu0 0.0
    %153 = vmatpush1.msra.mxu0 0.0
    %154 = vmatprep.subr.mxu0 0.0
    %155 = vmatpush1.msra.mxu0 0.0
    %156 = vmatprep.subr.mxu0 0.0
    %157 = vmatpush1.msra.mxu0 0.0
    %158 = vmatprep.subr.mxu0 0.0
    %159 = vmatpush1.msra.mxu0 0.0
    %160 = vmatprep.subr.mxu0 0.0
    %161 = vmatpush1.msra.mxu0 0.0
    %162 = vmatprep.subr.mxu0 0.0
    %163 = vmatpush1.msra.mxu0 0.0
    %164 = vmatprep.subr.mxu0 0.0
    %165 = vmatpush1.msra.mxu0 0.0
    %166 = vmatprep.subr.mxu0 0.0
    %167 = vmatpush1.msra.mxu0 0.0
    %168 = vmatprep.subr.mxu0 0.0
    %169 = vmatpush1.msra.mxu0 0.0
    %170 = vmatprep.subr.mxu0 0.0
    %171 = vmatpush1.msra.mxu0 0.0
    %172 = vmatprep.subr.mxu0 0.0
    %173 = vmatpush1.msra.mxu0 0.0
    %174 = vmatprep.subr.mxu0 0.0
    %175 = vmatpush1.msra.mxu0 0.0
    %176 = vmatprep.subr.mxu0 0.0
    %177 = vmatpush1.msra.mxu0 0.0
    %178 = vmatprep.subr.mxu0 0.0
    %179 = vmatpush1.msra.mxu0 0.0
    %180 = vmatprep.subr.mxu0 0.0
    %181 = vmatpush1.msra.mxu0 0.0
    %182 = vmatprep.subr.mxu0 0.0
    %183 = vmatpush1.msra.mxu0 0.0
    %184 = vmatprep.mubr.f32.mxu0 0.0
    %185 = vmatmul.mubr.f32.gmra.mrb[0].mxu0 %v115
    %v186 = vpop.f32.mrb[0].mxu0
    %v187 = vadd.f32 0.0, %v186
    %v188 = vpop.f32.mrb[0].mxu0
    %189 = vmatprep.mubr.f32.mxu0 0.0
    %190 = vmatmul.mubr.f32.gmra.mrb[0].mxu0 %v118
    %v191 = vpop.f32.mrb[0].mxu0
    %v192 = vadd.f32 0.0, %v191
    %v193 = vpop.f32.mrb[0].mxu0
    %194 = vdwg.mxu0
    %v195 = vld [vmem:[%s3] sm:$0xff]
    %v196 = vadd.f32 %v187, %v195
    %v197 = vadd.f32 %v192, %v195
    %v198 = vld [vmem:[%s4] sm:$0x1]
    %v199 = vld [vmem:[%s5] sm:$0x1]
    %vm200 = vcmask 261120
    %v201 = vsel %vm200, %v196, 0.0
    %202 = vadd.xlane.f32.xlu0 %v201
    %v203 = vpop.xlane.xlu0 %202
    %v204 = vsel %vm200, %v197, 0.0
    %205 = vadd.xlane.f32.xlu0 %v204
    %v206 = vpop.xlane.xlu0 %205
    %v207 = vrcp.pop 32.0
    %v208 = vmul.f32 %v203, %v207
    %v209 = vmul.f32 %v206, %v207
    %v210 = vsub.f32 %v196, %v208
    %v211 = vsub.f32 %v197, %v209
    %v212 = vmul.f32 %v210, %v210
    %v213 = vmul.f32 %v211, %v211
    %v214 = vsel %vm200, %v212, 0.0
    %215 = vadd.xlane.f32.xlu0 %v214
    %v216 = vpop.xlane.xlu0 %215
    %v217 = vsel %vm200, %v213, 0.0
    %218 = vadd.xlane.f32.xlu0 %v217
    %v219 = vpop.xlane.xlu0 %218
    %v220 = vmul.f32 %v216, %v207
    %v221 = vmul.f32 %v219, %v207
    %v222 = vadd.f32 %v220, 1e-12
    %v223 = vadd.f32 %v221, 1e-12
    %v224 = vrsqrt.pop %v222
    %v225 = vrsqrt.pop %v223
    %v226 = vmul.f32 %v210, %v224
    %v227 = vmul.f32 %v211, %v225
    %v229 = vlaneseq
    %v230 = vshrl.u32 %v229, 7
    %v231 = vsub.s32 0, %v230
    %v232 = vrot.slane %v198, %v231
    %v234 = vmul.f32 %v226, %v232
    %v235 = vmul.f32 %v227, %v232
    %v237 = vlaneseq
    %v238 = vshrl.u32 %v237, 7
    %v239 = vsub.s32 0, %v238
    %v240 = vrot.slane %v199, %v239
    %v242 = vadd.f32 %v234, %v240
    %v243 = vadd.f32 %v235, %v240
    %v244 = vld [vmem:[%s6] sm:$0xff]
    %v245 = vld [vmem:[%s6 + $0x8] sm:$0xff]
    %v246 = vld [vmem:[%s6 + $0x10] sm:$0xff]
    %v247 = vld [vmem:[%s6 + $0x18] sm:$0xff]
    %v248 = vld [vmem:[%s7] sm:$0x1]
    %v250 = vlaneseq
    %v251 = vshrl.u32 %v250, 7
    %v252 = vsub.s32 0, %v251
    %v253 = vrot.slane %v248, %v252
    %v256 = vsel %vm200, %v242, 0
    %v259 = vsel %vm200, %v243, 0
    %261 = vmatprep.subr.mxu0 0.0
    %262 = vmatpush1.msra.mxu0 %v244
    %263 = vmatprep.subr.mxu0 0.0
    %264 = vmatpush1.msra.mxu0 %v245
    %265 = vmatprep.subr.mxu0 0.0
    %266 = vmatpush1.msra.mxu0 %v246
    %267 = vmatprep.subr.mxu0 0.0
    %268 = vmatpush1.msra.mxu0 %v247
    %269 = vmatprep.subr.mxu0 0.0
    %270 = vmatpush1.msra.mxu0 0.0
    %271 = vmatprep.subr.mxu0 0.0
    %272 = vmatpush1.msra.mxu0 0.0
    %273 = vmatprep.subr.mxu0 0.0
    %274 = vmatpush1.msra.mxu0 0.0
    %275 = vmatprep.subr.mxu0 0.0
    %276 = vmatpush1.msra.mxu0 0.0
    %277 = vmatprep.subr.mxu0 0.0
    %278 = vmatpush1.msra.mxu0 0.0
    %279 = vmatprep.subr.mxu0 0.0
    %280 = vmatpush1.msra.mxu0 0.0
    %281 = vmatprep.subr.mxu0 0.0
    %282 = vmatpush1.msra.mxu0 0.0
    %283 = vmatprep.subr.mxu0 0.0
    %284 = vmatpush1.msra.mxu0 0.0
    %285 = vmatprep.subr.mxu0 0.0
    %286 = vmatpush1.msra.mxu0 0.0
    %287 = vmatprep.subr.mxu0 0.0
    %288 = vmatpush1.msra.mxu0 0.0
    %289 = vmatprep.subr.mxu0 0.0
    %290 = vmatpush1.msra.mxu0 0.0
    %291 = vmatprep.subr.mxu0 0.0
    %292 = vmatpush1.msra.mxu0 0.0
    %293 = vmatprep.subr.mxu0 0.0
    %294 = vmatpush1.msra.mxu0 0.0
    %295 = vmatprep.subr.mxu0 0.0
    %296 = vmatpush1.msra.mxu0 0.0
    %297 = vmatprep.subr.mxu0 0.0
    %298 = vmatpush1.msra.mxu0 0.0
    %299 = vmatprep.subr.mxu0 0.0
    %300 = vmatpush1.msra.mxu0 0.0
    %301 = vmatprep.subr.mxu0 0.0
    %302 = vmatpush1.msra.mxu0 0.0
    %303 = vmatprep.subr.mxu0 0.0
    %304 = vmatpush1.msra.mxu0 0.0
    %305 = vmatprep.subr.mxu0 0.0
    %306 = vmatpush1.msra.mxu0 0.0
    %307 = vmatprep.subr.mxu0 0.0
    %308 = vmatpush1.msra.mxu0 0.0
    %309 = vmatprep.subr.mxu0 0.0
    %310 = vmatpush1.msra.mxu0 0.0
    %311 = vmatprep.subr.mxu0 0.0
    %312 = vmatpush1.msra.mxu0 0.0
    %313 = vmatprep.subr.mxu0 0.0
    %314 = vmatpush1.msra.mxu0 0.0
    %315 = vmatprep.subr.mxu0 0.0
    %316 = vmatpush1.msra.mxu0 0.0
    %317 = vmatprep.subr.mxu0 0.0
    %318 = vmatpush1.msra.mxu0 0.0
    %319 = vmatprep.subr.mxu0 0.0
    %320 = vmatpush1.msra.mxu0 0.0
    %321 = vmatprep.subr.mxu0 0.0
    %322 = vmatpush1.msra.mxu0 0.0
    %323 = vmatprep.subr.mxu0 0.0
    %324 = vmatpush1.msra.mxu0 0.0
    %325 = vmatprep.mubr.f32.mxu0 0.0
    %326 = vmatmul.mubr.f32.gmra.mrb[0].mxu0 %v256
    %v327 = vpop.f32.mrb[0].mxu0
    %v328 = vadd.f32 %v253, %v327
    %v329 = vpop.f32.mrb[0].mxu0
    %330 = vmatprep.mubr.f32.mxu0 0.0
    %331 = vmatmul.mubr.f32.gmra.mrb[0].mxu0 %v259
    %v332 = vpop.f32.mrb[0].mxu0
    %v333 = vadd.f32 %v253, %v332
    %v334 = vpop.f32.mrb[0].mxu0
    %335 = vdwg.mxu0
    %v336 = vld [vmem:[%s1] sm:$0x3]
    %v337 = vcvt.s32.f32 %v336
    %v338 = vsub.f32 1.0, %v337
    %v339 = vmul.f32 %v338, -1e+09
    %341 = vrot.lane.b32.xlu0 %v328, 96
    %v342 = vpop.permute.xlu0 %341
    %v343 = vsel %vm200, %v328, 0
    %v345 = vsel %vm200, %v342, 0
    %347 = vmatprep.subr.mxu0 0.0
    %348 = vmatpush1.xpose.msra.mxu0 %v345
    %349 = vmatprep.subr.mxu0 0.0
    %350 = vmatpush1.xpose.msra.mxu0 0.0
    %351 = vmatprep.subr.mxu0 0.0
    %352 = vmatpush1.xpose.msra.mxu0 0.0
    %353 = vmatprep.subr.mxu0 0.0
    %354 = vmatpush1.xpose.msra.mxu0 0.0
    %355 = vmatprep.subr.mxu0 0.0
    %356 = vmatpush1.xpose.msra.mxu0 0.0
    %357 = vmatprep.subr.mxu0 0.0
    %358 = vmatpush1.xpose.msra.mxu0 0.0
    %359 = vmatprep.subr.mxu0 0.0
    %360 = vmatpush1.xpose.msra.mxu0 0.0
    %361 = vmatprep.subr.mxu0 0.0
    %362 = vmatpush1.xpose.msra.mxu0 0.0
    %363 = vmatprep.subr.mxu0 0.0
    %364 = vmatpush1.xpose.msra.mxu0 0.0
    %365 = vmatprep.subr.mxu0 0.0
    %366 = vmatpush1.xpose.msra.mxu0 0.0
    %367 = vmatprep.subr.mxu0 0.0
    %368 = vmatpush1.xpose.msra.mxu0 0.0
    %369 = vmatprep.subr.mxu0 0.0
    %370 = vmatpush1.xpose.msra.mxu0 0.0
    %371 = vmatprep.subr.mxu0 0.0
    %372 = vmatpush1.xpose.msra.mxu0 0.0
    %373 = vmatprep.subr.mxu0 0.0
    %374 = vmatpush1.xpose.msra.mxu0 0.0
    %375 = vmatprep.subr.mxu0 0.0
    %376 = vmatpush1.xpose.msra.mxu0 0.0
    %377 = vmatprep.subr.mxu0 0.0
    %378 = vmatpush1.xpose.msra.mxu0 0.0
    %379 = vmatprep.subr.mxu0 0.0
    %380 = vmatpush1.xpose.msra.mxu0 0.0
    %381 = vmatprep.subr.mxu0 0.0
    %382 = vmatpush1.xpose.msra.mxu0 0.0
    %383 = vmatprep.subr.mxu0 0.0
    %384 = vmatpush1.xpose.msra.mxu0 0.0
    %385 = vmatprep.subr.mxu0 0.0
    %386 = vmatpush1.xpose.msra.mxu0 0.0
    %387 = vmatprep.subr.mxu0 0.0
    %388 = vmatpush1.xpose.msra.mxu0 0.0
    %389 = vmatprep.subr.mxu0 0.0
    %390 = vmatpush1.xpose.msra.mxu0 0.0
    %391 = vmatprep.subr.mxu0 0.0
    %392 = vmatpush1.xpose.msra.mxu0 0.0
    %393 = vmatprep.subr.mxu0 0.0
    %394 = vmatpush1.xpose.msra.mxu0 0.0
    %395 = vmatprep.subr.mxu0 0.0
    %396 = vmatpush1.xpose.msra.mxu0 0.0
    %397 = vmatprep.subr.mxu0 0.0
    %398 = vmatpush1.xpose.msra.mxu0 0.0
    %399 = vmatprep.subr.mxu0 0.0
    %400 = vmatpush1.xpose.msra.mxu0 0.0
    %401 = vmatprep.subr.mxu0 0.0
    %402 = vmatpush1.xpose.msra.mxu0 0.0
    %403 = vmatprep.subr.mxu0 0.0
    %404 = vmatpush1.xpose.msra.mxu0 0.0
    %405 = vmatprep.subr.mxu0 0.0
    %406 = vmatpush1.xpose.msra.mxu0 0.0
    %407 = vmatprep.subr.mxu0 0.0
    %408 = vmatpush1.xpose.msra.mxu0 0.0
    %409 = vmatprep.subr.mxu0 0.0
    %410 = vmatpush1.xpose.msra.mxu0 0.0
    %411 = vmatprep.mubr.f32.mxu0 0.0
    %412 = vmatmul.mubr.f32.gmra.mrb[0].mxu0 %v343
    %v413 = vpop.f32.mrb[0].mxu0
    %v414 = vadd.f32 0.0, %v413
    %v415 = vpop.f32.mrb[0].mxu0
    %416 = vdwg.mxu0
    %418 = vrot.lane.b32.xlu0 %v333, 96
    %v419 = vpop.permute.xlu0 %418
    %v420 = vsel %vm200, %v333, 0
    %v422 = vsel %vm200, %v419, 0
    %424 = vmatprep.subr.mxu0 0.0
    %425 = vmatpush1.xpose.msra.mxu0 %v422
    %426 = vmatprep.subr.mxu0 0.0
    %427 = vmatpush1.xpose.msra.mxu0 0.0
    %428 = vmatprep.subr.mxu0 0.0
    %429 = vmatpush1.xpose.msra.mxu0 0.0
    %430 = vmatprep.subr.mxu0 0.0
    %431 = vmatpush1.xpose.msra.mxu0 0.0
    %432 = vmatprep.subr.mxu0 0.0
    %433 = vmatpush1.xpose.msra.mxu0 0.0
    %434 = vmatprep.subr.mxu0 0.0
    %435 = vmatpush1.xpose.msra.mxu0 0.0
    %436 = vmatprep.subr.mxu0 0.0
    %437 = vmatpush1.xpose.msra.mxu0 0.0
    %438 = vmatprep.subr.mxu0 0.0
    %439 = vmatpush1.xpose.msra.mxu0 0.0
    %440 = vmatprep.subr.mxu0 0.0
    %441 = vmatpush1.xpose.msra.mxu0 0.0
    %442 = vmatprep.subr.mxu0 0.0
    %443 = vmatpush1.xpose.msra.mxu0 0.0
    %444 = vmatprep.subr.mxu0 0.0
    %445 = vmatpush1.xpose.msra.mxu0 0.0
    %446 = vmatprep.subr.mxu0 0.0
    %447 = vmatpush1.xpose.msra.mxu0 0.0
    %448 = vmatprep.subr.mxu0 0.0
    %449 = vmatpush1.xpose.msra.mxu0 0.0
    %450 = vmatprep.subr.mxu0 0.0
    %451 = vmatpush1.xpose.msra.mxu0 0.0
    %452 = vmatprep.subr.mxu0 0.0
    %453 = vmatpush1.xpose.msra.mxu0 0.0
    %454 = vmatprep.subr.mxu0 0.0
    %455 = vmatpush1.xpose.msra.mxu0 0.0
    %456 = vmatprep.subr.mxu0 0.0
    %457 = vmatpush1.xpose.msra.mxu0 0.0
    %458 = vmatprep.subr.mxu0 0.0
    %459 = vmatpush1.xpose.msra.mxu0 0.0
    %460 = vmatprep.subr.mxu0 0.0
    %461 = vmatpush1.xpose.msra.mxu0 0.0
    %462 = vmatprep.subr.mxu0 0.0
    %463 = vmatpush1.xpose.msra.mxu0 0.0
    %464 = vmatprep.subr.mxu0 0.0
    %465 = vmatpush1.xpose.msra.mxu0 0.0
    %466 = vmatprep.subr.mxu0 0.0
    %467 = vmatpush1.xpose.msra.mxu0 0.0
    %468 = vmatprep.subr.mxu0 0.0
    %469 = vmatpush1.xpose.msra.mxu0 0.0
    %470 = vmatprep.subr.mxu0 0.0
    %471 = vmatpush1.xpose.msra.mxu0 0.0
    %472 = vmatprep.subr.mxu0 0.0
    %473 = vmatpush1.xpose.msra.mxu0 0.0
    %474 = vmatprep.subr.mxu0 0.0
    %475 = vmatpush1.xpose.msra.mxu0 0.0
    %476 = vmatprep.subr.mxu0 0.0
    %477 = vmatpush1.xpose.msra.mxu0 0.0
    %478 = vmatprep.subr.mxu0 0.0
    %479 = vmatpush1.xpose.msra.mxu0 0.0
    %480 = vmatprep.subr.mxu0 0.0
    %481 = vmatpush1.xpose.msra.mxu0 0.0
    %482 = vmatprep.subr.mxu0 0.0
    %483 = vmatpush1.xpose.msra.mxu0 0.0
    %484 = vmatprep.subr.mxu0 0.0
    %485 = vmatpush1.xpose.msra.mxu0 0.0
    %486 = vmatprep.subr.mxu0 0.0
    %487 = vmatpush1.xpose.msra.mxu0 0.0
    %488 = vmatprep.mubr.f32.mxu0 0.0
    %489 = vmatmul.mubr.f32.gmra.mrb[0].mxu0 %v420
    %v490 = vpop.f32.mrb[0].mxu0
    %v491 = vadd.f32 0.0, %v490
    %v492 = vpop.f32.mrb[0].mxu0
    %493 = vdwg.mxu0
    %v494 = vmul.f32 %v414, 0.17677669
    %v495 = vmul.f32 %v491, 0.17677669
    %v498 = vunpack.c.l.s4 1966171168
    %v499 = vunpack.c.0.s8 %v498
    %v500 = vlaneseq
    %v501 = vshrl.u32 %v500, 7
    %v502 = vsub.s32 %v499, %v501
    %v503 = vrot.slane %v339, %v502
    %v504 = vcombine.high %v503, %v503
    %v506 = vunpack.c.l.s4 1966171168
    %v507 = vunpack.c.0.s8 %v506
    %v508 = vlaneseq
    %v509 = vshrl.u32 %v508, 7
    %v510 = vsub.s32 %v507, %v509
    %v511 = vrot.slane %v503, %v510
    %v513 = vunpack.c.l.s4 1966171168
    %v514 = vunpack.c.0.s8 %v513
    %v515 = vlaneseq
    %v516 = vshrl.u32 %v515, 7
    %v517 = vsub.s32 %v514, %v516
    %v518 = vrot.slane %v504, %v517
    %v519 = vlaneseq
    %v520 = vshrl.u32 %v519, 7
    %v521 = vsub.s32 0, %v520
    %v522 = vrot.slane %v511, %v521
    %v523 = vlaneseq
    %v524 = vshrl.u32 %v523, 7
    %v525 = vsub.s32 0, %v524
    %v526 = vrot.slane %v518, %v525
    %v529 = vadd.f32 %v494, %v522
    %v530 = vadd.f32 %v495, %v526
    %vm531 = vcmask 64512
    %v532 = vsel %vm531, %v529, -inf
    %533 = vmax.xlane.f32.xlu0 %v532
    %v534 = vpop.xlane.xlu0 %533
    %v535 = vsel %vm531, %v530, -inf
    %536 = vmax.xlane.f32.xlu0 %v535
    %v537 = vpop.xlane.xlu0 %536
    %v538 = vsub.f32 %v529, %v534
    %v539 = vsub.f32 %v530, %v537
    %v540 = vmul.f32 %v538, 1.442695
    %v541 = vpow.pop %v540
    %v542 = vmul.f32 %v539, 1.442695
    %v543 = vpow.pop %v542
    %v544 = vsel %vm531, %v541, 0.0
    %545 = vadd.xlane.f32.xlu0 %v544
    %v546 = vpop.xlane.xlu0 %545
    %v547 = vsel %vm531, %v543, 0.0
    %548 = vadd.xlane.f32.xlu0 %v547
    %v549 = vpop.xlane.xlu0 %548
    %v550 = vrcp.pop %v546
    %v551 = vmul.f32 %v541, %v550
    %v552 = vrcp.pop %v549
    %v553 = vmul.f32 %v543, %v552
    %554 = vrot.lane.b32.xlu0 %v328, 64
    %v555 = vpop.permute.xlu0 %554
    %v558 = vsel %vm531, %v551, 0
    %560 = vmatprep.subr.mxu0 0.0
    %561 = vmatpush1.msra.mxu0 %v555
    %562 = vmatprep.subr.mxu0 0.0
    %563 = vmatpush1.msra.mxu0 0.0
    %564 = vmatprep.subr.mxu0 0.0
    %565 = vmatpush1.msra.mxu0 0.0
    %566 = vmatprep.subr.mxu0 0.0
    %567 = vmatpush1.msra.mxu0 0.0
    %568 = vmatprep.subr.mxu0 0.0
    %569 = vmatpush1.msra.mxu0 0.0
    %570 = vmatprep.subr.mxu0 0.0
    %571 = vmatpush1.msra.mxu0 0.0
    %572 = vmatprep.subr.mxu0 0.0
    %573 = vmatpush1.msra.mxu0 0.0
    %574 = vmatprep.subr.mxu0 0.0
    %575 = vmatpush1.msra.mxu0 0.0
    %576 = vmatprep.subr.mxu0 0.0
    %577 = vmatpush1.msra.mxu0 0.0
    %578 = vmatprep.subr.mxu0 0.0
    %579 = vmatpush1.msra.mxu0 0.0
    %580 = vmatprep.subr.mxu0 0.0
    %581 = vmatpush1.msra.mxu0 0.0
    %582 = vmatprep.subr.mxu0 0.0
    %583 = vmatpush1.msra.mxu0 0.0
    %584 = vmatprep.subr.mxu0 0.0
    %585 = vmatpush1.msra.mxu0 0.0
    %586 = vmatprep.subr.mxu0 0.0
    %587 = vmatpush1.msra.mxu0 0.0
    %588 = vmatprep.subr.mxu0 0.0
    %589 = vmatpush1.msra.mxu0 0.0
    %590 = vmatprep.subr.mxu0 0.0
    %591 = vmatpush1.msra.mxu0 0.0
    %592 = vmatprep.subr.mxu0 0.0
    %593 = vmatpush1.msra.mxu0 0.0
    %594 = vmatprep.subr.mxu0 0.0
    %595 = vmatpush1.msra.mxu0 0.0
    %596 = vmatprep.subr.mxu0 0.0
    %597 = vmatpush1.msra.mxu0 0.0
    %598 = vmatprep.subr.mxu0 0.0
    %599 = vmatpush1.msra.mxu0 0.0
    %600 = vmatprep.subr.mxu0 0.0
    %601 = vmatpush1.msra.mxu0 0.0
    %602 = vmatprep.subr.mxu0 0.0
    %603 = vmatpush1.msra.mxu0 0.0
    %604 = vmatprep.subr.mxu0 0.0
    %605 = vmatpush1.msra.mxu0 0.0
    %606 = vmatprep.subr.mxu0 0.0
    %607 = vmatpush1.msra.mxu0 0.0
    %608 = vmatprep.subr.mxu0 0.0
    %609 = vmatpush1.msra.mxu0 0.0
    %610 = vmatprep.subr.mxu0 0.0
    %611 = vmatpush1.msra.mxu0 0.0
    %612 = vmatprep.subr.mxu0 0.0
    %613 = vmatpush1.msra.mxu0 0.0
    %614 = vmatprep.subr.mxu0 0.0
    %615 = vmatpush1.msra.mxu0 0.0
    %616 = vmatprep.subr.mxu0 0.0
    %617 = vmatpush1.msra.mxu0 0.0
    %618 = vmatprep.subr.mxu0 0.0
    %619 = vmatpush1.msra.mxu0 0.0
    %620 = vmatprep.subr.mxu0 0.0
    %621 = vmatpush1.msra.mxu0 0.0
    %622 = vmatprep.subr.mxu0 0.0
    %623 = vmatpush1.msra.mxu0 0.0
    %624 = vmatprep.mubr.f32.mxu0 0.0
    %625 = vmatmul.mubr.f32.gmra.mrb[0].mxu0 %v558
    %v626 = vpop.f32.mrb[0].mxu0
    %v627 = vadd.f32 0.0, %v626
    %v628 = vpop.f32.mrb[0].mxu0
    %629 = vdwg.mxu0
    %630 = vrot.lane.b32.xlu0 %v333, 64
    %v631 = vpop.permute.xlu0 %630
    %v634 = vsel %vm531, %v553, 0
    %636 = vmatprep.subr.mxu0 0.0
    %637 = vmatpush1.msra.mxu0 %v631
    %638 = vmatprep.subr.mxu0 0.0
    %639 = vmatpush1.msra.mxu0 0.0
    %640 = vmatprep.subr.mxu0 0.0
    %641 = vmatpush1.msra.mxu0 0.0
    %642 = vmatprep.subr.mxu0 0.0
    %643 = vmatpush1.msra.mxu0 0.0
    %644 = vmatprep.subr.mxu0 0.0
    %645 = vmatpush1.msra.mxu0 0.0
    %646 = vmatprep.subr.mxu0 0.0
    %647 = vmatpush1.msra.mxu0 0.0
    %648 = vmatprep.subr.mxu0 0.0
    %649 = vmatpush1.msra.mxu0 0.0
    %650 = vmatprep.subr.mxu0 0.0
    %651 = vmatpush1.msra.mxu0 0.0
    %652 = vmatprep.subr.mxu0 0.0
    %653 = vmatpush1.msra.mxu0 0.0
    %654 = vmatprep.subr.mxu0 0.0
    %655 = vmatpush1.msra.mxu0 0.0
    %656 = vmatprep.subr.mxu0 0.0
    %657 = vmatpush1.msra.mxu0 0.0
    %658 = vmatprep.subr.mxu0 0.0
    %659 = vmatpush1.msra.mxu0 0.0
    %660 = vmatprep.subr.mxu0 0.0
    %661 = vmatpush1.msra.mxu0 0.0
    %662 = vmatprep.subr.mxu0 0.0
    %663 = vmatpush1.msra.mxu0 0.0
    %664 = vmatprep.subr.mxu0 0.0
    %665 = vmatpush1.msra.mxu0 0.0
    %666 = vmatprep.subr.mxu0 0.0
    %667 = vmatpush1.msra.mxu0 0.0
    %668 = vmatprep.subr.mxu0 0.0
    %669 = vmatpush1.msra.mxu0 0.0
    %670 = vmatprep.subr.mxu0 0.0
    %671 = vmatpush1.msra.mxu0 0.0
    %672 = vmatprep.subr.mxu0 0.0
    %673 = vmatpush1.msra.mxu0 0.0
    %674 = vmatprep.subr.mxu0 0.0
    %675 = vmatpush1.msra.mxu0 0.0
    %676 = vmatprep.subr.mxu0 0.0
    %677 = vmatpush1.msra.mxu0 0.0
    %678 = vmatprep.subr.mxu0 0.0
    %679 = vmatpush1.msra.mxu0 0.0
    %680 = vmatprep.subr.mxu0 0.0
    %681 = vmatpush1.msra.mxu0 0.0
    %682 = vmatprep.subr.mxu0 0.0
    %683 = vmatpush1.msra.mxu0 0.0
    %684 = vmatprep.subr.mxu0 0.0
    %685 = vmatpush1.msra.mxu0 0.0
    %686 = vmatprep.subr.mxu0 0.0
    %687 = vmatpush1.msra.mxu0 0.0
    %688 = vmatprep.subr.mxu0 0.0
    %689 = vmatpush1.msra.mxu0 0.0
    %690 = vmatprep.subr.mxu0 0.0
    %691 = vmatpush1.msra.mxu0 0.0
    %692 = vmatprep.subr.mxu0 0.0
    %693 = vmatpush1.msra.mxu0 0.0
    %694 = vmatprep.subr.mxu0 0.0
    %695 = vmatpush1.msra.mxu0 0.0
    %696 = vmatprep.subr.mxu0 0.0
    %697 = vmatpush1.msra.mxu0 0.0
    %698 = vmatprep.subr.mxu0 0.0
    %699 = vmatpush1.msra.mxu0 0.0
    %700 = vmatprep.mubr.f32.mxu0 0.0
    %701 = vmatmul.mubr.f32.gmra.mrb[0].mxu0 %v634
    %v702 = vpop.f32.mrb[0].mxu0
    %v703 = vadd.f32 0.0, %v702
    %v704 = vpop.f32.mrb[0].mxu0
    %705 = vdwg.mxu0
    %v706 = vld [vmem:[%s8] sm:$0xff]
    %v707 = vld [vmem:[%s8 + $0x8] sm:$0xff]
    %v708 = vld [vmem:[%s8 + $0x10] sm:$0xff]
    %v709 = vld [vmem:[%s8 + $0x18] sm:$0xff]
    %v710 = vld [vmem:[%s9] sm:$0x1]
    %v712 = vlaneseq
    %v713 = vshrl.u32 %v712, 7
    %v714 = vsub.s32 0, %v713
    %v715 = vrot.slane %v710, %v714
    %v718 = vsel %vm200, %v627, 0
    %v721 = vsel %vm200, %v703, 0
    %723 = vmatprep.subr.mxu0 0.0
    %724 = vmatpush1.msra.mxu0 %v706
    %725 = vmatprep.subr.mxu0 0.0
    %726 = vmatpush1.msra.mxu0 %v707
    %727 = vmatprep.subr.mxu0 0.0
    %728 = vmatpush1.msra.mxu0 %v708
    %729 = vmatprep.subr.mxu0 0.0
    %730 = vmatpush1.msra.mxu0 %v709
    %731 = vmatprep.subr.mxu0 0.0
    %732 = vmatpush1.msra.mxu0 0.0
    %733 = vmatprep.subr.mxu0 0.0
    %734 = vmatpush1.msra.mxu0 0.0
    %735 = vmatprep.subr.mxu0 0.0
    %736 = vmatpush1.msra.mxu0 0.0
    %737 = vmatprep.subr.mxu0 0.0
    %738 = vmatpush1.msra.mxu0 0.0
    %739 = vmatprep.subr.mxu0 0.0
    %740 = vmatpush1.msra.mxu0 0.0
    %741 = vmatprep.subr.mxu0 0.0
    %742 = vmatpush1.msra.mxu0 0.0
    %743 = vmatprep.subr.mxu0 0.0
    %744 = vmatpush1.msra.mxu0 0.0
    %745 = vmatprep.subr.mxu0 0.0
    %746 = vmatpush1.msra.mxu0 0.0
    %747 = vmatprep.subr.mxu0 0.0
    %748 = vmatpush1.msra.mxu0 0.0
    %749 = vmatprep.subr.mxu0 0.0
    %750 = vmatpush1.msra.mxu0 0.0
    %751 = vmatprep.subr.mxu0 0.0
    %752 = vmatpush1.msra.mxu0 0.0
    %753 = vmatprep.subr.mxu0 0.0
    %754 = vmatpush1.msra.mxu0 0.0
    %755 = vmatprep.subr.mxu0 0.0
    %756 = vmatpush1.msra.mxu0 0.0
    %757 = vmatprep.subr.mxu0 0.0
    %758 = vmatpush1.msra.mxu0 0.0
    %759 = vmatprep.subr.mxu0 0.0
    %760 = vmatpush1.msra.mxu0 0.0
    %761 = vmatprep.subr.mxu0 0.0
    %762 = vmatpush1.msra.mxu0 0.0
    %763 = vmatprep.subr.mxu0 0.0
    %764 = vmatpush1.msra.mxu0 0.0
    %765 = vmatprep.subr.mxu0 0.0
    %766 = vmatpush1.msra.mxu0 0.0
    %767 = vmatprep.subr.mxu0 0.0
    %768 = vmatpush1.msra.mxu0 0.0
    %769 = vmatprep.subr.mxu0 0.0
    %770 = vmatpush1.msra.mxu0 0.0
    %771 = vmatprep.subr.mxu0 0.0
    %772 = vmatpush1.msra.mxu0 0.0
    %773 = vmatprep.subr.mxu0 0.0
    %774 = vmatpush1.msra.mxu0 0.0
    %775 = vmatprep.subr.mxu0 0.0
    %776 = vmatpush1.msra.mxu0 0.0
    %777 = vmatprep.subr.mxu0 0.0
    %778 = vmatpush1.msra.mxu0 0.0
    %779 = vmatprep.subr.mxu0 0.0
    %780 = vmatpush1.msra.mxu0 0.0
    %781 = vmatprep.subr.mxu0 0.0
    %782 = vmatpush1.msra.mxu0 0.0
    %783 = vmatprep.subr.mxu0 0.0
    %784 = vmatpush1.msra.mxu0 0.0
    %785 = vmatprep.subr.mxu0 0.0
    %786 = vmatpush1.msra.mxu0 0.0
    %787 = vmatprep.mubr.f32.mxu0 0.0
    %788 = vmatmul.mubr.f32.gmra.mrb[0].mxu0 %v718
    %v789 = vpop.f32.mrb[0].mxu0
    %v790 = vadd.f32 %v715, %v789
    %v791 = vpop.f32.mrb[0].mxu0
    %792 = vmatprep.mubr.f32.mxu0 0.0
    %793 = vmatmul.mubr.f32.gmra.mrb[0].mxu0 %v721
    %v794 = vpop.f32.mrb[0].mxu0
    %v795 = vadd.f32 %v715, %v794
    %v796 = vpop.f32.mrb[0].mxu0
    %797 = vdwg.mxu0
    %v798 = vadd.f32 %v242, %v790
    %v799 = vadd.f32 %v243, %v795
    %v800 = vld [vmem:[%s10] sm:$0x1]
    %v801 = vld [vmem:[%s11] sm:$0x1]
    %v802 = vsel %vm200, %v798, 0.0
    %803 = vadd.xlane.f32.xlu0 %v802
    %v804 = vpop.xlane.xlu0 %803
    %v805 = vsel %vm200, %v799, 0.0
    %806 = vadd.xlane.f32.xlu0 %v805
    %v807 = vpop.xlane.xlu0 %806
    %v808 = vmul.f32 %v804, %v207
    %v809 = vmul.f32 %v807, %v207
    %v810 = vsub.f32 %v798, %v808
    %v811 = vsub.f32 %v799, %v809
    %v812 = vmul.f32 %v810, %v810
    %v813 = vmul.f32 %v811, %v811
    %v814 = vsel %vm200, %v812, 0.0
    %815 = vadd.xlane.f32.xlu0 %v814
    %v816 = vpop.xlane.xlu0 %815
    %v817 = vsel %vm200, %v813, 0.0
    %818 = vadd.xlane.f32.xlu0 %v817
    %v819 = vpop.xlane.xlu0 %818
    %v820 = vmul.f32 %v816, %v207
    %v821 = vmul.f32 %v819, %v207
    %v822 = vadd.f32 %v820, 1e-12
    %v823 = vadd.f32 %v821, 1e-12
    %v824 = vrsqrt.pop %v822
    %v825 = vrsqrt.pop %v823
    %v826 = vmul.f32 %v810, %v824
    %v827 = vmul.f32 %v811, %v825
    %v829 = vlaneseq
    %v830 = vshrl.u32 %v829, 7
    %v831 = vsub.s32 0, %v830
    %v832 = vrot.slane %v800, %v831
    %v834 = vmul.f32 %v826, %v832
    %v835 = vmul.f32 %v827, %v832
    %v837 = vlaneseq
    %v838 = vshrl.u32 %v837, 7
    %v839 = vsub.s32 0, %v838
    %v840 = vrot.slane %v801, %v839
    %v842 = vadd.f32 %v834, %v840
    %v843 = vadd.f32 %v835, %v840
    %v844 = vld [vmem:[%s12] sm:$0xff]
    %v845 = vld [vmem:[%s12 + $0x8] sm:$0xff]
    %v846 = vld [vmem:[%s12 + $0x10] sm:$0xff]
    %v847 = vld [vmem:[%s12 + $0x18] sm:$0xff]
    %v848 = vld [vmem:[%s13] sm:$0x1]
    %v850 = vlaneseq
    %v851 = vshrl.u32 %v850, 7
    %v852 = vsub.s32 0, %v851
    %v853 = vrot.slane %v848, %v852
    %v856 = vsel %vm200, %v842, 0
    %v859 = vsel %vm200, %v843, 0
    %861 = vmatprep.subr.mxu0 0.0
    %862 = vmatpush1.msra.mxu0 %v844
    %863 = vmatprep.subr.mxu0 0.0
    %864 = vmatpush1.msra.mxu0 %v845
    %865 = vmatprep.subr.mxu0 0.0
    %866 = vmatpush1.msra.mxu0 %v846
    %867 = vmatprep.subr.mxu0 0.0
    %868 = vmatpush1.msra.mxu0 %v847
    %869 = vmatprep.subr.mxu0 0.0
    %870 = vmatpush1.msra.mxu0 0.0
    %871 = vmatprep.subr.mxu0 0.0
    %872 = vmatpush1.msra.mxu0 0.0
    %873 = vmatprep.subr.mxu0 0.0
    %874 = vmatpush1.msra.mxu0 0.0
    %875 = vmatprep.subr.mxu0 0.0
    %876 = vmatpush1.msra.mxu0 0.0
    %877 = vmatprep.subr.mxu0 0.0
    %878 = vmatpush1.msra.mxu0 0.0
    %879 = vmatprep.subr.mxu0 0.0
    %880 = vmatpush1.msra.mxu0 0.0
    %881 = vmatprep.subr.mxu0 0.0
    %882 = vmatpush1.msra.mxu0 0.0
    %883 = vmatprep.subr.mxu0 0.0
    %884 = vmatpush1.msra.mxu0 0.0
    %885 = vmatprep.subr.mxu0 0.0
    %886 = vmatpush1.msra.mxu0 0.0
    %887 = vmatprep.subr.mxu0 0.0
    %888 = vmatpush1.msra.mxu0 0.0
    %889 = vmatprep.subr.mxu0 0.0
    %890 = vmatpush1.msra.mxu0 0.0
    %891 = vmatprep.subr.mxu0 0.0
    %892 = vmatpush1.msra.mxu0 0.0
    %893 = vmatprep.subr.mxu0 0.0
    %894 = vmatpush1.msra.mxu0 0.0
    %895 = vmatprep.subr.mxu0 0.0
    %896 = vmatpush1.msra.mxu0 0.0
    %897 = vmatprep.subr.mxu0 0.0
    %898 = vmatpush1.msra.mxu0 0.0
    %899 = vmatprep.subr.mxu0 0.0
    %900 = vmatpush1.msra.mxu0 0.0
    %901 = vmatprep.subr.mxu0 0.0
    %902 = vmatpush1.msra.mxu0 0.0
    %903 = vmatprep.subr.mxu0 0.0
    %904 = vmatpush1.msra.mxu0 0.0
    %905 = vmatprep.subr.mxu0 0.0
    %906 = vmatpush1.msra.mxu0 0.0
    %907 = vmatprep.subr.mxu0 0.0
    %908 = vmatpush1.msra.mxu0 0.0
    %909 = vmatprep.subr.mxu0 0.0
    %910 = vmatpush1.msra.mxu0 0.0
    %911 = vmatprep.subr.mxu0 0.0
    %912 = vmatpush1.msra.mxu0 0.0
    %913 = vmatprep.subr.mxu0 0.0
    %914 = vmatpush1.msra.mxu0 0.0
    %915 = vmatprep.subr.mxu0 0.0
    %916 = vmatpush1.msra.mxu0 0.0
    %917 = vmatprep.subr.mxu0 0.0
    %918 = vmatpush1.msra.mxu0 0.0
    %919 = vmatprep.subr.mxu0 0.0
    %920 = vmatpush1.msra.mxu0 0.0
    %921 = vmatprep.subr.mxu0 0.0
    %922 = vmatpush1.msra.mxu0 0.0
    %923 = vmatprep.subr.mxu0 0.0
    %924 = vmatpush1.msra.mxu0 0.0
    %925 = vmatprep.mubr.f32.mxu0 0.0
    %926 = vmatmul.mubr.f32.gmra.mrb[0].mxu0 %v856
    %v927 = vpop.f32.mrb[0].mxu0
    %v928 = vadd.f32 %v853, %v927
    %v929 = vpop.f32.mrb[0].mxu0
    %930 = vmatprep.mubr.f32.mxu0 0.0
    %931 = vmatmul.mubr.f32.gmra.mrb[0].mxu0 %v859
    %v932 = vpop.f32.mrb[0].mxu0
    %v933 = vadd.f32 %v853, %v932
    %v934 = vpop.f32.mrb[0].mxu0
    %935 = vdwg.mxu0
    %v936 = vmul.f32 %v928, 0.5
    %v937 = vmul.f32 %v933, 0.5
    %v938 = vmul.f32 %v928, 0.044715
    %v939 = vmul.f32 %v933, 0.044715
    %v940 = vmul.f32 %v938, %v928
    %v941 = vmul.f32 %v939, %v933
    %v942 = vmul.f32 %v940, %v928
    %v943 = vmul.f32 %v941, %v933
    %v944 = vadd.f32 %v928, %v942
    %v945 = vadd.f32 %v933, %v943
    %v946 = vmul.f32 %v944, 0.7978846
    %v947 = vmul.f32 %v945, 0.7978846
    %v948 = vtanh.pop %v946
    %v949 = vtanh.pop %v947
    %v950 = vadd.f32 %v948, 1.0
    %v951 = vadd.f32 %v949, 1.0
    %v952 = vmul.f32 %v936, %v950
    %v953 = vmul.f32 %v937, %v951
    %v954 = vld [vmem:[%s14] sm:$0xff]
    %v955 = vld [vmem:[%s14 + $0x8] sm:$0xff]
    %v956 = vld [vmem:[%s14 + $0x10] sm:$0xff]
    %v957 = vld [vmem:[%s14 + $0x18] sm:$0xff]
    %v958 = vld [vmem:[%s14 + $0x20] sm:$0xff]
    %v959 = vld [vmem:[%s14 + $0x28] sm:$0xff]
    %v960 = vld [vmem:[%s14 + $0x30] sm:$0xff]
    %v961 = vld [vmem:[%s14 + $0x38] sm:$0xff]
    %v962 = vld [vmem:[%s14 + $0x40] sm:$0xff]
    %v963 = vld [vmem:[%s14 + $0x48] sm:$0xff]
    %v964 = vld [vmem:[%s14 + $0x50] sm:$0xff]
    %v965 = vld [vmem:[%s14 + $0x58] sm:$0xff]
    %v966 = vld [vmem:[%s14 + $0x60] sm:$0xff]
    %v967 = vld [vmem:[%s14 + $0x68] sm:$0xff]
    %v968 = vld [vmem:[%s14 + $0x70] sm:$0xff]
    %v969 = vld [vmem:[%s14 + $0x78] sm:$0xff]
    %v970 = vld [vmem:[%s15] sm:$0x1]
    %v972 = vlaneseq
    %v973 = vshrl.u32 %v972, 7
    %v974 = vsub.s32 0, %v973
    %v975 = vrot.slane %v970, %v974
    %977 = vmatprep.subr.mxu0 0.0
    %978 = vmatpush1.msra.mxu0 %v954
    %979 = vmatprep.subr.mxu0 0.0
    %980 = vmatpush1.msra.mxu0 %v955
    %981 = vmatprep.subr.mxu0 0.0
    %982 = vmatpush1.msra.mxu0 %v956
    %983 = vmatprep.subr.mxu0 0.0
    %984 = vmatpush1.msra.mxu0 %v957
    %985 = vmatprep.subr.mxu0 0.0
    %986 = vmatpush1.msra.mxu0 %v958
    %987 = vmatprep.subr.mxu0 0.0
    %988 = vmatpush1.msra.mxu0 %v959
    %989 = vmatprep.subr.mxu0 0.0
    %990 = vmatpush1.msra.mxu0 %v960
    %991 = vmatprep.subr.mxu0 0.0
    %992 = vmatpush1.msra.mxu0 %v961
    %993 = vmatprep.subr.mxu0 0.0
    %994 = vmatpush1.msra.mxu0 %v962
    %995 = vmatprep.subr.mxu0 0.0
    %996 = vmatpush1.msra.mxu0 %v963
    %997 = vmatprep.subr.mxu0 0.0
    %998 = vmatpush1.msra.mxu0 %v964
    %999 = vmatprep.subr.mxu0 0.0
    %1000 = vmatpush1.msra.mxu0 %v965
    %1001 = vmatprep.subr.mxu0 0.0
    %1002 = vmatpush1.msra.mxu0 %v966
    %1003 = vmatprep.subr.mxu0 0.0
    %1004 = vmatpush1.msra.mxu0 %v967
    %1005 = vmatprep.subr.mxu0 0.0
    %1006 = vmatpush1.msra.mxu0 %v968
    %1007 = vmatprep.subr.mxu0 0.0
    %1008 = vmatpush1.msra.mxu0 %v969
    %1009 = vmatprep.subr.mxu0 0.0
    %1010 = vmatpush1.msra.mxu0 0.0
    %1011 = vmatprep.subr.mxu0 0.0
    %1012 = vmatpush1.msra.mxu0 0.0
    %1013 = vmatprep.subr.mxu0 0.0
    %1014 = vmatpush1.msra.mxu0 0.0
    %1015 = vmatprep.subr.mxu0 0.0
    %1016 = vmatpush1.msra.mxu0 0.0
    %1017 = vmatprep.subr.mxu0 0.0
    %1018 = vmatpush1.msra.mxu0 0.0
    %1019 = vmatprep.subr.mxu0 0.0
    %1020 = vmatpush1.msra.mxu0 0.0
    %1021 = vmatprep.subr.mxu0 0.0
    %1022 = vmatpush1.msra.mxu0 0.0
    %1023 = vmatprep.subr.mxu0 0.0
    %1024 = vmatpush1.msra.mxu0 0.0
    %1025 = vmatprep.subr.mxu0 0.0
    %1026 = vmatpush1.msra.mxu0 0.0
    %1027 = vmatprep.subr.mxu0 0.0
    %1028 = vmatpush1.msra.mxu0 0.0
    %1029 = vmatprep.subr.mxu0 0.0
    %1030 = vmatpush1.msra.mxu0 0.0
    %1031 = vmatprep.subr.mxu0 0.0
    %1032 = vmatpush1.msra.mxu0 0.0
    %1033 = vmatprep.subr.mxu0 0.0
    %1034 = vmatpush1.msra.mxu0 0.0
    %1035 = vmatprep.subr.mxu0 0.0
    %1036 = vmatpush1.msra.mxu0 0.0
    %1037 = vmatprep.subr.mxu0 0.0
    %1038 = vmatpush1.msra.mxu0 0.0
    %1039 = vmatprep.subr.mxu0 0.0
    %1040 = vmatpush1.msra.mxu0 0.0
    %1041 = vmatprep.mubr.f32.mxu0 0.0
    %1042 = vmatmul.mubr.f32.gmra.mrb[0].mxu0 %v952
    %v1043 = vpop.f32.mrb[0].mxu0
    %v1044 = vadd.f32 %v975, %v1043
    %v1045 = vpop.f32.mrb[0].mxu0
    %1046 = vmatprep.mubr.f32.mxu0 0.0
    %1047 = vmatmul.mubr.f32.gmra.mrb[0].mxu0 %v953
    %v1048 = vpop.f32.mrb[0].mxu0
    %v1049 = vadd.f32 %v975, %v1048
    %v1050 = vpop.f32.mrb[0].mxu0
    %1051 = vdwg.mxu0
    %v1052 = vadd.f32 %v842, %v1044
    %v1053 = vadd.f32 %v843, %v1049
    %v1054 = vld [vmem:[%s16] sm:$0x1]
    %v1055 = vld [vmem:[%s17] sm:$0x1]
    %v1056 = vsel %vm200, %v1052, 0.0
    %1057 = vadd.xlane.f32.xlu0 %v1056
    %v1058 = vpop.xlane.xlu0 %1057
    %v1059 = vsel %vm200, %v1053, 0.0
    %1060 = vadd.xlane.f32.xlu0 %v1059
    %v1061 = vpop.xlane.xlu0 %1060
    %v1062 = vmul.f32 %v1058, %v207
    %v1063 = vmul.f32 %v1061, %v207
    %v1064 = vsub.f32 %v1052, %v1062
    %v1065 = vsub.f32 %v1053, %v1063
    %v1066 = vmul.f32 %v1064, %v1064
    %v1067 = vmul.f32 %v1065, %v1065
    %v1068 = vsel %vm200, %v1066, 0.0
    %1069 = vadd.xlane.f32.xlu0 %v1068
    %v1070 = vpop.xlane.xlu0 %1069
    %v1071 = vsel %vm200, %v1067, 0.0
    %1072 = vadd.xlane.f32.xlu0 %v1071
    %v1073 = vpop.xlane.xlu0 %1072
    %v1074 = vmul.f32 %v1070, %v207
    %v1075 = vmul.f32 %v1073, %v207
    %v1076 = vadd.f32 %v1074, 1e-12
    %v1077 = vadd.f32 %v1075, 1e-12
    %v1078 = vrsqrt.pop %v1076
    %v1079 = vrsqrt.pop %v1077
    %v1080 = vmul.f32 %v1064, %v1078
    %v1081 = vmul.f32 %v1065, %v1079
    %v1083 = vlaneseq
    %v1084 = vshrl.u32 %v1083, 7
    %v1085 = vsub.s32 0, %v1084
    %v1086 = vrot.slane %v1054, %v1085
    %v1088 = vmul.f32 %v1080, %v1086
    %v1089 = vmul.f32 %v1081, %v1086
    %v1091 = vlaneseq
    %v1092 = vshrl.u32 %v1091, 7
    %v1093 = vsub.s32 0, %v1092
    %v1094 = vrot.slane %v1055, %v1093
    %v1096 = vadd.f32 %v1088, %v1094
    %v1097 = vadd.f32 %v1089, %v1094
    %v1098 = vld [vmem:[%s18] sm:$0xff]
    %v1099 = vld [vmem:[%s18 + $0x8] sm:$0xff]
    %v1100 = vld [vmem:[%s18 + $0x10] sm:$0xff]
    %v1101 = vld [vmem:[%s18 + $0x18] sm:$0xff]
    %v1102 = vld [vmem:[%s19] sm:$0x1]
    %v1104 = vlaneseq
    %v1105 = vshrl.u32 %v1104, 7
    %v1106 = vsub.s32 0, %v1105
    %v1107 = vrot.slane %v1102, %v1106
    %v1111 = vrot.slane %v1097, 7
    %vm1112 = vcmask 1041409
    %v1113 = vsel %vm1112, %v1111, %v1096
    %v1114 = vsel %vm200, %v1113, 0
    %1116 = vmatprep.subr.mxu0 0.0
    %1117 = vmatpush1.msra.mxu0 %v1098
    %1118 = vmatprep.subr.mxu0 0.0
    %1119 = vmatpush1.msra.mxu0 %v1099
    %1120 = vmatprep.subr.mxu0 0.0
    %1121 = vmatpush1.msra.mxu0 %v1100
    %1122 = vmatprep.subr.mxu0 0.0
    %1123 = vmatpush1.msra.mxu0 %v1101
    %1124 = vmatprep.subr.mxu0 0.0
    %1125 = vmatpush1.msra.mxu0 0.0
    %1126 = vmatprep.subr.mxu0 0.0
    %1127 = vmatpush1.msra.mxu0 0.0
    %1128 = vmatprep.subr.mxu0 0.0
    %1129 = vmatpush1.msra.mxu0 0.0
    %1130 = vmatprep.subr.mxu0 0.0
    %1131 = vmatpush1.msra.mxu0 0.0
    %1132 = vmatprep.subr.mxu0 0.0
    %1133 = vmatpush1.msra.mxu0 0.0
    %1134 = vmatprep.subr.mxu0 0.0
    %1135 = vmatpush1.msra.mxu0 0.0
    %1136 = vmatprep.subr.mxu0 0.0
    %1137 = vmatpush1.msra.mxu0 0.0
    %1138 = vmatprep.subr.mxu0 0.0
    %1139 = vmatpush1.msra.mxu0 0.0
    %1140 = vmatprep.subr.mxu0 0.0
    %1141 = vmatpush1.msra.mxu0 0.0
    %1142 = vmatprep.subr.mxu0 0.0
    %1143 = vmatpush1.msra.mxu0 0.0
    %1144 = vmatprep.subr.mxu0 0.0
    %1145 = vmatpush1.msra.mxu0 0.0
    %1146 = vmatprep.subr.mxu0 0.0
    %1147 = vmatpush1.msra.mxu0 0.0
    %1148 = vmatprep.subr.mxu0 0.0
    %1149 = vmatpush1.msra.mxu0 0.0
    %1150 = vmatprep.subr.mxu0 0.0
    %1151 = vmatpush1.msra.mxu0 0.0
    %1152 = vmatprep.subr.mxu0 0.0
    %1153 = vmatpush1.msra.mxu0 0.0
    %1154 = vmatprep.subr.mxu0 0.0
    %1155 = vmatpush1.msra.mxu0 0.0
    %1156 = vmatprep.subr.mxu0 0.0
    %1157 = vmatpush1.msra.mxu0 0.0
    %1158 = vmatprep.subr.mxu0 0.0
    %1159 = vmatpush1.msra.mxu0 0.0
    %1160 = vmatprep.subr.mxu0 0.0
    %1161 = vmatpush1.msra.mxu0 0.0
    %1162 = vmatprep.subr.mxu0 0.0
    %1163 = vmatpush1.msra.mxu0 0.0
    %1164 = vmatprep.subr.mxu0 0.0
    %1165 = vmatpush1.msra.mxu0 0.0
    %1166 = vmatprep.subr.mxu0 0.0
    %1167 = vmatpush1.msra.mxu0 0.0
    %1168 = vmatprep.subr.mxu0 0.0
    %1169 = vmatpush1.msra.mxu0 0.0
    %1170 = vmatprep.subr.mxu0 0.0
    %1171 = vmatpush1.msra.mxu0 0.0
    %1172 = vmatprep.subr.mxu0 0.0
    %1173 = vmatpush1.msra.mxu0 0.0
    %1174 = vmatprep.subr.mxu0 0.0
    %1175 = vmatpush1.msra.mxu0 0.0
    %1176 = vmatprep.subr.mxu0 0.0
    %1177 = vmatpush1.msra.mxu0 0.0
    %1178 = vmatprep.subr.mxu0 0.0
    %1179 = vmatpush1.msra.mxu0 0.0
    %1180 = vmatprep.mubr.f32.mxu0 0.0
    %1181 = vmatmul.mubr.f32.gmra.mrb[0].mxu0 %v1114
    %v1182 = vpop.f32.mrb[0].mxu0
    %v1183 = vadd.f32 %v1107, %v1182
    %v1184 = vpop.f32.mrb[0].mxu0
    %1185 = vdwg.mxu0
    %v1186 = vmul.f32 %v1183, 0.5
    %v1187 = vmul.f32 %v1183, 0.044715
    %v1188 = vmul.f32 %v1187, %v1183
    %v1189 = vmul.f32 %v1188, %v1183
    %v1190 = vadd.f32 %v1183, %v1189
    %v1191 = vmul.f32 %v1190, 0.7978846
    %v1192 = vtanh.pop %v1191
    %v1193 = vadd.f32 %v1192, 1.0
    %v1194 = vmul.f32 %v1186, %v1193
    %v1195 = vld [vmem:[%s20] sm:$0xff]
    %v1196 = vld [vmem:[%s20 + $0x8] sm:$0xff]
    %v1197 = vld [vmem:[%s20 + $0x10] sm:$0xff]
    %v1198 = vld [vmem:[%s20 + $0x18] sm:$0xff]
    %v1199 = vld [vmem:[%s21] sm:$0x1]
    %v1201 = vlaneseq
    %v1202 = vshrl.u32 %v1201, 7
    %v1203 = vsub.s32 0, %v1202
    %v1204 = vrot.slane %v1199, %v1203
    %v1207 = vsel %vm200, %v1194, 0
    %1209 = vmatprep.subr.mxu0 0.0
    %1210 = vmatpush1.msra.mxu0 %v1195
    %1211 = vmatprep.subr.mxu0 0.0
    %1212 = vmatpush1.msra.mxu0 %v1196
    %1213 = vmatprep.subr.mxu0 0.0
    %1214 = vmatpush1.msra.mxu0 %v1197
    %1215 = vmatprep.subr.mxu0 0.0
    %1216 = vmatpush1.msra.mxu0 %v1198
    %1217 = vmatprep.subr.mxu0 0.0
    %1218 = vmatpush1.msra.mxu0 0.0
    %1219 = vmatprep.subr.mxu0 0.0
    %1220 = vmatpush1.msra.mxu0 0.0
    %1221 = vmatprep.subr.mxu0 0.0
    %1222 = vmatpush1.msra.mxu0 0.0
    %1223 = vmatprep.subr.mxu0 0.0
    %1224 = vmatpush1.msra.mxu0 0.0
    %1225 = vmatprep.subr.mxu0 0.0
    %1226 = vmatpush1.msra.mxu0 0.0
    %1227 = vmatprep.subr.mxu0 0.0
    %1228 = vmatpush1.msra.mxu0 0.0
    %1229 = vmatprep.subr.mxu0 0.0
    %1230 = vmatpush1.msra.mxu0 0.0
    %1231 = vmatprep.subr.mxu0 0.0
    %1232 = vmatpush1.msra.mxu0 0.0
    %1233 = vmatprep.subr.mxu0 0.0
    %1234 = vmatpush1.msra.mxu0 0.0
    %1235 = vmatprep.subr.mxu0 0.0
    %1236 = vmatpush1.msra.mxu0 0.0
    %1237 = vmatprep.subr.mxu0 0.0
    %1238 = vmatpush1.msra.mxu0 0.0
    %1239 = vmatprep.subr.mxu0 0.0
    %1240 = vmatpush1.msra.mxu0 0.0
    %1241 = vmatprep.subr.mxu0 0.0
    %1242 = vmatpush1.msra.mxu0 0.0
    %1243 = vmatprep.subr.mxu0 0.0
    %1244 = vmatpush1.msra.mxu0 0.0
    %1245 = vmatprep.subr.mxu0 0.0
    %1246 = vmatpush1.msra.mxu0 0.0
    %1247 = vmatprep.subr.mxu0 0.0
    %1248 = vmatpush1.msra.mxu0 0.0
    %1249 = vmatprep.subr.mxu0 0.0
    %1250 = vmatpush1.msra.mxu0 0.0
    %1251 = vmatprep.subr.mxu0 0.0
    %1252 = vmatpush1.msra.mxu0 0.0
    %1253 = vmatprep.subr.mxu0 0.0
    %1254 = vmatpush1.msra.mxu0 0.0
    %1255 = vmatprep.subr.mxu0 0.0
    %1256 = vmatpush1.msra.mxu0 0.0
    %1257 = vmatprep.subr.mxu0 0.0
    %1258 = vmatpush1.msra.mxu0 0.0
    %1259 = vmatprep.subr.mxu0 0.0
    %1260 = vmatpush1.msra.mxu0 0.0
    %1261 = vmatprep.subr.mxu0 0.0
    %1262 = vmatpush1.msra.mxu0 0.0
    %1263 = vmatprep.subr.mxu0 0.0
    %1264 = vmatpush1.msra.mxu0 0.0
    %1265 = vmatprep.subr.mxu0 0.0
    %1266 = vmatpush1.msra.mxu0 0.0
    %1267 = vmatprep.subr.mxu0 0.0
    %1268 = vmatpush1.msra.mxu0 0.0
    %1269 = vmatprep.subr.mxu0 0.0
    %1270 = vmatpush1.msra.mxu0 0.0
    %1271 = vmatprep.subr.mxu0 0.0
    %1272 = vmatpush1.msra.mxu0 0.0
    %1273 = vmatprep.mubr.f32.mxu0 0.0
    %1274 = vmatmul.mubr.f32.gmra.mrb[0].mxu0 %v1207
    %v1275 = vpop.f32.mrb[0].mxu0
    %v1276 = vadd.f32 %v1204, %v1275
    %v1277 = vpop.f32.mrb[0].mxu0
    %1278 = vdwg.mxu0
    %vm1279 = vcmask 123904
    %1280 = vst.msk [vmem:[#allocation2] sm:$0x3] %vm1279, %v1276
    %1282 = vrot.lane.b32.xlu0 %v1276, 112
    %v1283 = vpop.permute.xlu0 %1282
    %vm1285 = vcmask 58368
    %1286 = vst.msk [vmem:[#allocation4] sm:$0x3] %vm1285, %v1283
    %v1287 = vld [vmem:[%s22] sm:$0x3]
    %v1288 = vsel %vm1279, %v1276, -inf
    %1289 = vmax.xlane.f32.xlu0 %v1288
    %v1290 = vpop.xlane.xlu0 %1289
    %v1291 = vsub.f32 %v1276, %v1290
    %v1292 = vmul.f32 %v1291, 1.442695
    %v1293 = vpow.pop %v1292
    %v1294 = vsel %vm1279, %v1293, 0.0
    %1295 = vadd.xlane.f32.xlu0 %v1294
    %v1296 = vpop.xlane.xlu0 %1295
    %v1297 = vlog2.pop %v1296
    %v1298 = vmul.f32 %v1297, 0.6931472
    %v1299 = vadd.f32 %v1298, %v1290
    %1300 = vset.pattern.permute.xlu0 0
    %1301 = vperm.xlu0 %1300, %v1287
    %v1302 = vpop.permute.xlu0 %1301
    %vm1303 = vcmp.eq.s32.totalorder %v84, %v1302
    %v1304 = vsel %vm1303, 1, 0
    %v1305 = vcvt.s32.f32 %v1304
    %v1306 = vmul.f32 %v1276, %v1305
    %v1307 = vsel %vm1279, %v1306, 0.0
    %1308 = vadd.xlane.f32.xlu0 %v1307
    %v1309 = vpop.xlane.xlu0 %1308
    %v1310 = vsub.f32 %v1299, %v1309
    %vm1311 = vcmask 1024
    %v1312 = vsel %vm1311, %v1310, 0.0
    %1313 = vadd.xlane.f32.xlu0 %v1312
    %v1314 = vpop.xlane.xlu0 %1313
    %v1315 = vrot.slane %v1314, 4
    %v1316 = vadd.f32 %v1314, %v1315
    %v1317 = vrot.slane %v1316, 2
    %v1318 = vadd.f32 %v1316, %v1317
    %v1319 = vrot.slane %v1318, 1
    %v1320 = vadd.f32 %v1318, %v1319
    %s1321 = vtos %v1320
    %v1322 = vstv %s1321
    %v1323 = vld [vmem:[%s23] sm:$0x3]
    %vm1324 = vcmask 189568
    %v1325 = vsel %vm1324, %v1276, -inf
    %1326 = vmax.xlane.f32.xlu0 %v1325
    %v1327 = vpop.xlane.xlu0 %1326
    %v1328 = vsub.f32 %v1276, %v1327
    %v1329 = vmul.f32 %v1328, 1.442695
    %v1330 = vpow.pop %v1329
    %1332 = vrot.lane.b32.xlu0 %v1330, 112
    %v1333 = vpop.permute.xlu0 %1332
    %v1335 = vsel %vm1285, %v1333, 0.0
    %1336 = vadd.xlane.f32.xlu0 %v1335
    %v1337 = vpop.xlane.xlu0 %1336
    %v1338 = vlog2.pop %v1337
    %v1339 = vmul.f32 %v1338, 0.6931472
    %v1340 = vadd.f32 %v1339, %v1327
    %1341 = vset.pattern.permute.xlu0 0
    %1342 = vperm.xlu0 %1341, %v1323
    %v1343 = vpop.permute.xlu0 %1342
    %vm1344 = vcmp.eq.s32.totalorder %v84, %v1343
    %v1345 = vsel %vm1344, 1, 0
    %v1346 = vcvt.s32.f32 %v1345
    %1348 = vrot.lane.b32.xlu0 %v1346, 16
    %v1349 = vpop.permute.xlu0 %1348
    %v1351 = vmul.f32 %v1276, %v1349
    %1353 = vrot.lane.b32.xlu0 %v1351, 112
    %v1354 = vpop.permute.xlu0 %1353
    %v1356 = vsel %vm1285, %v1354, 0.0
    %1357 = vadd.xlane.f32.xlu0 %v1356
    %v1358 = vpop.xlane.xlu0 %1357
    %v1359 = vsub.f32 %v1340, %v1358
    %v1360 = vsel %vm1311, %v1359, 0.0
    %1361 = vadd.xlane.f32.xlu0 %v1360
    %v1362 = vpop.xlane.xlu0 %1361
    %v1363 = vrot.slane %v1362, 4
    %v1364 = vadd.f32 %v1362, %v1363
    %v1365 = vrot.slane %v1364, 2
    %v1366 = vadd.f32 %v1364, %v1365
    %v1367 = vrot.slane %v1366, 1
    %v1368 = vadd.f32 %v1366, %v1367
    %s1369 = vtos %v1368
    %v1370 = vstv %s1369
    %v1371 = vadd.f32 %v1322, %v1370
    %v1372 = vmul.f32 %v1371, 0.5
    %vm1373 = vcmask 0
    %1374 = vst.msk [vmem:[#allocation6] sm:$0x1] %vm1373, %v1372
    // Predicated region
    $region98: #{dual_classifier_forward.1} parent=1 // pred_check
      _
    $region99: #{dual_classifier_forward.1} parent=1 // pred_check_branch
      %1376 = sbr.rel (0) target = $region101
    $region100: #{dual_classifier_forward.1} parent=1 // pred_region
      %s1378 = ssub.s32 32, 32
      %1379 = vsyncadd [#allocation3], %s1378
      %s1381 = sshll.u32 [#allocation2], 4
      %s1382 = int_to_ptr.vmem [resolvable:$true] %s1381
      %1384 = dma.vmem_to_hbm [thread:$0]  %s1382, 32, %s24, [#allocation3]
    $region101: #{dual_classifier_forward.1} parent=1 // pred_fallthru
      _
    // Predicated region
    $region102: #{dual_classifier_forward.1} parent=1 // pred_check
      _
    $region103: #{dual_classifier_forward.1} parent=1 // pred_check_branch
      %1386 = sbr.rel (0) target = $region105
    $region104: #{dual_classifier_forward.1} parent=1 // pred_region
      %s1388 = ssub.s32 32, 32
      %1389 = vsyncadd [#allocation5], %s1388
      %s1391 = sshll.u32 [#allocation4], 4
      %s1392 = int_to_ptr.vmem [resolvable:$true] %s1391
      %1394 = dma.vmem_to_hbm [thread:$0]  %s1392, 32, %s25, [#allocation5]
    $region105: #{dual_classifier_forward.1} parent=1 // pred_fallthru
      _
    // Predicated region
    $region106: #{dual_classifier_forward.1} parent=1 // pred_check
      _
    $region107: #{dual_classifier_forward.1} parent=1 // pred_check_branch
      %1396 = sbr.rel (0) target = $region109
    $region108: #{dual_classifier_forward.1} parent=1 // pred_region
      %s1398 = ssub.s32 16, 16
      %1399 = vsyncadd [#allocation5], %s1398
      %s1401 = sshll.u32 [#allocation6], 4
      %s1402 = int_to_ptr.vmem [resolvable:$true] %s1401
      %1404 = dma.vmem_to_hbm [thread:$0]  %s1402, 16, %s26, [#allocation5]
    $region109: #{dual_classifier_forward.1} parent=1 // pred_fallthru
      _
    // Predicated region
    $region110: #{dual_classifier_forward.1} parent=1 // pred_check
      _
    $region111: #{dual_classifier_forward.1} parent=1 // pred_check_branch
      %1406 = sbr.rel (0) target = $region113
    $region112: #{dual_classifier_forward.1} parent=1 // pred_region
      %1407 = dma.done [#allocation3], 32
    $region113: #{dual_classifier_forward.1} parent=1 // pred_fallthru
      _
    // Predicated region
    $region114: #{dual_classifier_forward.1} parent=1 // pred_check
      _
    $region115: #{dual_classifier_forward.1} parent=1 // pred_check_branch
      %1409 = sbr.rel (0) target = $region117
    $region116: #{dual_classifier_forward.1} parent=1 // pred_region
      %1410 = dma.done [#allocation5], 32
    $region117: #{dual_classifier_forward.1} parent=1 // pred_fallthru
      _
    // Predicated region
    $region118: #{dual_classifier_forward.1} parent=1 // pred_check
      _
    $region119: #{dual_classifier_forward.1} parent=1 // pred_check_branch
      %1412 = sbr.rel (0) target = $region121
    $region120: #{dual_classifier_forward.1} parent=1 // pred_region
      %1413 = dma.done [#allocation5], 16
    $region121: #{dual_classifier_forward.1} parent=1 // pred_fallthru
      _
    %1414 = vsyncpa [#allocation3], 1
    %1415 = vsyncpa [#allocation5], 1

</llo_original>
